<compile_context>
chip_gen: v7x
topology: tpu7x:2x2x1
jax: 0.10.0
libtpu: 0.0.40
codegen_flags: <defaults>
</compile_context>

<pallas_src>
import math
import functools

import jax
import jax.numpy as jnp
from jax import lax
from jax.experimental import pallas as pl
from jax.experimental.pallas import tpu as pltpu


def _tile(dim, target):
    """Largest clean tile: `target` if it divides `dim`, else the full dim."""
    return target if dim % target == 0 else dim


# ----------------------------- projection kernel -----------------------------

def _matmul_kernel(x_ref, w_ref, o_ref, acc_ref):
    @pl.when(pl.program_id(2) == 0)
    def _():
        acc_ref[...] = jnp.zeros(acc_ref.shape, acc_ref.dtype)

    acc_ref[...] += jnp.dot(
        x_ref[...], w_ref[...], preferred_element_type=jnp.float32
    )

    @pl.when(pl.program_id(2) == pl.num_programs(2) - 1)
    def _():
        o_ref[...] = acc_ref[...].astype(o_ref.dtype)


def linear(x2d, w_t, *, tm=256, tn=256, tk=512):
    """y = x2d @ w_t with x2d (M, K), w_t (K, N); tiled + f32 accumulation."""
    M, K = x2d.shape
    K2, N = w_t.shape
    assert K == K2
    tm, tn, tk = _tile(M, tm), _tile(N, tn), _tile(K, tk)
    return pl.pallas_call(
        _matmul_kernel,
        out_shape=jax.ShapeDtypeStruct((M, N), x2d.dtype),
        grid=(M // tm, N // tn, K // tk),
        in_specs=[
            pl.BlockSpec((tm, tk), lambda i, j, k: (i, k)),
            pl.BlockSpec((tk, tn), lambda i, j, k: (k, j)),
        ],
        out_specs=pl.BlockSpec((tm, tn), lambda i, j, k: (i, j)),
        scratch_shapes=[pltpu.VMEM((tm, tn), jnp.float32)],
        compiler_params=pltpu.CompilerParams(
            dimension_semantics=("parallel", "parallel", "arbitrary"),
            vmem_limit_bytes=48 * 1024 * 1024,
        ),
    )(x2d, w_t)


# ----------------------------- attention kernel ------------------------------

def _flash_attn_kernel(q_ref, k_ref, v_ref, cos_q_ref, sin_q_ref,
                       cos_k_ref, sin_k_ref, o_ref,
                       qrot_sc, krot_sc, m_sc, l_sc, acc_sc):
    n_rep, tq, hd = q_ref.shape[1], q_ref.shape[2], q_ref.shape[3]
    tk = k_ref.shape[2]
    half = hd // 2

    q_start = pl.program_id(2) * tq
    k_start = pl.program_id(3) * tk

    # First KV tile for this (batch, kv-head, q-tile): init stats, rotate q once.
    # 1/sqrt(hd) is already folded into cos_q/sin_q in the wrapper.
    @pl.when(pl.program_id(3) == 0)
    def _init():
        m_sc[...] = jnp.full(m_sc.shape, -jnp.inf, m_sc.dtype)
        l_sc[...] = jnp.zeros(l_sc.shape, l_sc.dtype)
        acc_sc[...] = jnp.zeros(acc_sc.shape, acc_sc.dtype)
        q = q_ref[0]                               # (n_rep, tq, hd) = [re | im]
        q_re, q_im = q[..., :half], q[..., half:]
        cos = cos_q_ref[...][None]                 # (1, tq, half)
        sin = sin_q_ref[...][None]
        qrot_sc[:, :, :half] = (q_re * cos - q_im * sin).astype(qrot_sc.dtype)
        qrot_sc[:, :, half:] = (q_re * sin + q_im * cos).astype(qrot_sc.dtype)

    # Skip KV tiles entirely in the causal future of this q tile.
    @pl.when(k_start <= q_start + tq - 1)
    def _compute():
        k = k_ref[0, 0]                            # (tk, hd)
        k_re, k_im = k[:, :half], k[:, half:]
        cos = cos_k_ref[...]
        sin = sin_k_ref[...]
        krot_sc[:, :half] = (k_re * cos - k_im * sin).astype(krot_sc.dtype)
        krot_sc[:, half:] = (k_re * sin + k_im * cos).astype(krot_sc.dtype)

        q_rot = qrot_sc[...]                                       # (n_rep, tq, hd)
        k_rot = jnp.broadcast_to(krot_sc[...][None], (n_rep, tk, hd))
        s = jnp.einsum("rqd,rkd->rqk", q_rot, k_rot,
                       preferred_element_type=jnp.float32)         # (n_rep, tq, tk)

        # Per-tile causal mask (diagonal tile only actually needs it; cheap).
        row = lax.broadcasted_iota(jnp.int32, (tq, tk), 0) + q_start
        col = lax.broadcasted_iota(jnp.int32, (tq, tk), 1) + k_start
        s = jnp.where((col <= row)[None], s, -jnp.inf)

        m_prev = m_sc[...]
        m_new = jnp.maximum(m_prev, jnp.max(s, axis=-1, keepdims=True))
        alpha = jnp.exp(m_prev - m_new)
        p = jnp.exp(s - m_new)                                      # unnormalized
        l_sc[...] = alpha * l_sc[...] + jnp.sum(p, axis=-1, keepdims=True)
        v = jnp.broadcast_to(v_ref[0, 0][None], (n_rep, tk, hd))
        pv = jnp.einsum("rqk,rkd->rqd", p.astype(v.dtype), v,
                        preferred_element_type=jnp.float32)
        acc_sc[...] = alpha * acc_sc[...] + pv
        m_sc[...] = m_new

    # Last KV tile: deferred normalization (one reciprocal per row), write out.
    @pl.when(pl.program_id(3) == pl.num_programs(3) - 1)
    def _finalize():
        inv_l = pl.reciprocal(l_sc[...], approx=False)  # approx=True for prod speed
        o_ref[0] = (acc_sc[...] * inv_l).astype(o_ref.dtype)


def causal_attention(q, k, v, cos_q, sin_q, cos_k, sin_k, *, tq=128, tk=128):
    """q: (B, H, S, hd); k, v: (B, H_kv, S, hd). GQA via (B, H_kv) grid."""
    B, H, S, hd = q.shape
    H_kv = k.shape[1]
    n_rep = H // H_kv
    half = hd // 2
    tq = _tile(S, tq)
    tk = _tile(S, tk)
    return pl.pallas_call(
        _flash_attn_kernel,
        out_shape=jax.ShapeDtypeStruct((B, H, S, hd), q.dtype),
        grid=(B, H_kv, S // tq, S // tk),
        in_specs=[
            # all n_rep query heads sharing KV head h, resident across KV tiles
            pl.BlockSpec((1, n_rep, tq, hd), lambda b, h, qi, ki: (b, h, qi, 0)),
            pl.BlockSpec((1, 1, tk, hd), lambda b, h, qi, ki: (b, h, ki, 0)),
            pl.BlockSpec((1, 1, tk, hd), lambda b, h, qi, ki: (b, h, ki, 0)),
            pl.BlockSpec((tq, half), lambda b, h, qi, ki: (qi, 0)),
            pl.BlockSpec((tq, half), lambda b, h, qi, ki: (qi, 0)),
            pl.BlockSpec((tk, half), lambda b, h, qi, ki: (ki, 0)),
            pl.BlockSpec((tk, half), lambda b, h, qi, ki: (ki, 0)),
        ],
        out_specs=pl.BlockSpec((1, n_rep, tq, hd), lambda b, h, qi, ki: (b, h, qi, 0)),
        scratch_shapes=[
            pltpu.VMEM((n_rep, tq, hd), q.dtype),      # rotated+scaled q (kept over KV tiles)
            pltpu.VMEM((tk, hd), k.dtype),             # rotated k, current tile
            pltpu.VMEM((n_rep, tq, 1), jnp.float32),   # running max
            pltpu.VMEM((n_rep, tq, 1), jnp.float32),   # running sum
            pltpu.VMEM((n_rep, tq, hd), jnp.float32),  # unnormalized output acc
        ],
        compiler_params=pltpu.CompilerParams(
            dimension_semantics=("parallel", "parallel", "parallel", "arbitrary"),
            vmem_limit_bytes=48 * 1024 * 1024,
        ),
    )(q, k, v, cos_q, sin_q, cos_k, sin_k)


# ------------------------------ forward wrapper ------------------------------

def prepare_params(params):
    """One-time weight re-layout (kept out of the per-step hot path)."""
    return {
        "w_qkv": jnp.concatenate(
            [params["wq"].T, params["wk"].T, params["wv"].T], axis=1),
        "wo_t": params["wo"].T,
    }


def attention_forward(prep, x, freqs_cos, freqs_sin, n_heads, n_kv_heads):
    B, S, D = x.shape
    hd = D // n_heads
    dq = n_heads * hd
    dkv = n_kv_heads * hd

    # Fused QKV projection: one pass over x, one kernel launch.
    x2d = x.reshape(B * S, D)
    qkv = linear(x2d, prep["w_qkv"])                 # (B*S, dq + 2*dkv)
    xq = qkv[:, :dq]
    xk = qkv[:, dq:dq + dkv]
    xv = qkv[:, dq + dkv:]

    # De-interleave rotary pairs: [x0,x1,x2,...] -> [x0,x2,... | x1,x3,...]
    perm = jnp.concatenate([jnp.arange(0, hd, 2), jnp.arange(1, hd, 2)])
    q = xq.reshape(B, S, n_heads, hd)[..., perm].transpose(0, 2, 1, 3)
    k = xk.reshape(B, S, n_kv_heads, hd)[..., perm].transpose(0, 2, 1, 3)
    v = xv.reshape(B, S, n_kv_heads, hd).transpose(0, 2, 1, 3)
    # TODO(synk): fold these head-major transposes into the projection's
    # out_specs (write (B, H, S, hd) directly) to save the extra HBM passes.

    # Fold 1/sqrt(hd) into the q-side rotary tables (O(S*hd/2) instead of O(S*S)).
    scale = 1.0 / math.sqrt(hd)
    cos_q = freqs_cos * scale
    sin_q = freqs_sin * scale

    out = causal_attention(q, k, v, cos_q, sin_q, freqs_cos, freqs_sin)

    out2d = out.transpose(0, 2, 1, 3).reshape(B * S, n_heads * hd)
    y = linear(out2d, prep["wo_t"])
    # dropout p=0.0 (inference): identity.
    return y.reshape(B, S, D)


# ------------------------------- pure-JAX ref --------------------------------

def reference_forward(params, x, freqs_cos, freqs_sin, n_heads, n_kv_heads):
    B, S, D = x.shape
    hd = D // n_heads
    n_rep = n_heads // n_kv_heads
    xq = x @ params["wq"].T
    xk = x @ params["wk"].T
    xv = x @ params["wv"].T
    xq = xq.reshape(B, S, n_heads, hd)
    xk = xk.reshape(B, S, n_kv_heads, hd)
    xv = xv.reshape(B, S, n_kv_heads, hd)

    def rope(t):
        tr = t.reshape(t.shape[:-1] + (hd // 2, 2))
        r, i = tr[..., 0], tr[..., 1]
        cos = freqs_cos[None, :, None, :]
        sin = freqs_sin[None, :, None, :]
        out_r = r * cos - i * sin
        out_i = r * sin + i * cos
        return jnp.stack([out_r, out_i], axis=-1).reshape(t.shape)

    xq, xk = rope(xq), rope(xk)
    xk = jnp.repeat(xk, n_rep, axis=2)
    xv = jnp.repeat(xv, n_rep, axis=2)
    q = xq.transpose(0, 2, 1, 3)
    k = xk.transpose(0, 2, 1, 3)
    v = xv.transpose(0, 2, 1, 3)
    scores = jnp.einsum("bhqd,bhkd->bhqk", q, k) / math.sqrt(hd)
    mask = jnp.tril(jnp.ones((S, S), bool))
    scores = jnp.where(mask[None, None], scores, -jnp.inf)
    p = jax.nn.softmax(scores, axis=-1)
    out = jnp.einsum("bhqk,bhkd->bhqd", p, v)
    out = out.transpose(0, 2, 1, 3).reshape(B, S, -1)
    return out @ params["wo"].T


# ----------------------------------- main ------------------------------------

if __name__ == "__main__":
    B, S = 2, 8
    dim = 32
    n_heads, n_kv_heads = 4, 2
    hd = dim // n_heads

    key = jax.random.PRNGKey(0)
    kx, kq, kk, kv, ko = jax.random.split(key, 5)
    x = jax.random.normal(kx, (B, S, dim), jnp.float32)
    params = {
        "wq": jax.random.normal(kq, (n_heads * hd, dim), jnp.float32) * 0.05,
        "wk": jax.random.normal(kk, (n_kv_heads * hd, dim), jnp.float32) * 0.05,
        "wv": jax.random.normal(kv, (n_kv_heads * hd, dim), jnp.float32) * 0.05,
        "wo": jax.random.normal(ko, (dim, n_heads * hd), jnp.float32) * 0.05,
    }
    prep = prepare_params(params)

    # Precompute rotary tables (llama-style), shape (S, hd // 2).
    inv = 1.0 / (10000.0 ** (jnp.arange(0, hd, 2, dtype=jnp.float32) / hd))
    t = jnp.arange(S, dtype=jnp.float32)
    freqs = jnp.outer(t, inv)
    freqs_cos, freqs_sin = jnp.cos(freqs), jnp.sin(freqs)

    fwd = jax.jit(functools.partial(
        attention_forward, n_heads=n_heads, n_kv_heads=n_kv_heads))
    y = fwd(prep, x, freqs_cos, freqs_sin)
    y = jax.block_until_ready(y)

    y_ref = reference_forward(params, x, freqs_cos, freqs_sin, n_heads, n_kv_heads)
    assert y.shape == (B, S, dim)
    assert jnp.allclose(y, y_ref, rtol=1e-4, atol=1e-4)

    print("KERNEL_OK")
</pallas_src>

<mosaic_0001>
module attributes {stable_mosaic.version = 11 : i64} {
  func.func @_matmul_kernel(%arg0: i32, %arg1: i32, %arg2: i32, %arg3: memref<16x32xf32, #tpu.memory_space<vmem>>, %arg4: memref<32x64xf32, #tpu.memory_space<vmem>>, %arg5: memref<16x64xf32, #tpu.memory_space<vmem>>, %arg6: memref<16x64xf32, #tpu.memory_space<vmem>>) attributes {dimension_semantics = [#tpu.dimension_semantics<parallel>, #tpu.dimension_semantics<parallel>, #tpu.dimension_semantics<arbitrary>], iteration_bounds = array<i64: 1, 1, 1>, scalar_prefetch = 0 : i64, scratch_operands = 1 : i64, tpu.core_type = #tpu.core_type<tc>, window_params = [{transform_indices = @transform_0, window_bounds = array<i64: 16, 32>}, {transform_indices = @transform_1, window_bounds = array<i64: 32, 64>}, {transform_indices = @transform_2, window_bounds = array<i64: 16, 64>}]} {
    %c0_i32 = arith.constant 0 : i32
    %0 = arith.cmpi eq, %arg2, %c0_i32 : i32
    %1 = arith.extui %0 : i1 to i32
    %c0_i32_0 = arith.constant 0 : i32
    %2 = arith.cmpi ne, %1, %c0_i32_0 : i32
    scf.if %2 {
      %cst_10 = arith.constant 0.000000e+00 : f32
      %12 = vector.broadcast %cst_10 : f32 to vector<16x64xf32>
      %c0_11 = arith.constant 0 : index
      %c0_12 = arith.constant 0 : index
      %13 = vector.load %arg6[%c0_11, %c0_12] : memref<16x64xf32, #tpu.memory_space<vmem>>, vector<16x64xf32>
      tpu.vector_store %arg6[%c0_11, %c0_12], %12 {strides = array<i32>} : memref<16x64xf32, #tpu.memory_space<vmem>>, vector<16x64xf32>,
    } else {
    }
    %c0 = arith.constant 0 : index
    %c0_1 = arith.constant 0 : index
    %3 = vector.load %arg6[%c0, %c0_1] : memref<16x64xf32, #tpu.memory_space<vmem>>, vector<16x64xf32>
    %c0_2 = arith.constant 0 : index
    %c0_3 = arith.constant 0 : index
    %4 = vector.load %arg3[%c0_2, %c0_3] : memref<16x32xf32, #tpu.memory_space<vmem>>, vector<16x32xf32>
    %c0_4 = arith.constant 0 : index
    %c0_5 = arith.constant 0 : index
    %5 = vector.load %arg4[%c0_4, %c0_5] : memref<32x64xf32, #tpu.memory_space<vmem>>, vector<32x64xf32>
    %cst = arith.constant dense<0.000000e+00> : vector<16x64xf32>
    %6 = tpu.matmul %4, %5, %cst {dimension_numbers = #tpu.dot_dimension_numbers<[1], [0], [0], [1], [0, 0, 1, 1], [], []>} : vector<16x32xf32>, vector<32x64xf32>, vector<16x64xf32> -> vector<16x64xf32>
    %7 = arith.addf %3, %6 : vector<16x64xf32>
    %c0_6 = arith.constant 0 : index
    %c0_7 = arith.constant 0 : index
    %8 = vector.load %arg6[%c0_6, %c0_7] : memref<16x64xf32, #tpu.memory_space<vmem>>, vector<16x64xf32>
    tpu.vector_store %arg6[%c0_6, %c0_7], %7 {strides = array<i32>} : memref<16x64xf32, #tpu.memory_space<vmem>>, vector<16x64xf32>,
    %c0_i32_8 = arith.constant 0 : i32
    %9 = arith.cmpi eq, %arg2, %c0_i32_8 : i32
    %10 = arith.extui %9 : i1 to i32
    %c0_i32_9 = arith.constant 0 : i32
    %11 = arith.cmpi ne, %10, %c0_i32_9 : i32
    scf.if %11 {
      %c0_10 = arith.constant 0 : index
      %c0_11 = arith.constant 0 : index
      %12 = vector.load %arg6[%c0_10, %c0_11] : memref<16x64xf32, #tpu.memory_space<vmem>>, vector<16x64xf32>
      %c0_12 = arith.constant 0 : index
      %c0_13 = arith.constant 0 : index
      %13 = vector.load %arg5[%c0_12, %c0_13] : memref<16x64xf32, #tpu.memory_space<vmem>>, vector<16x64xf32>
      tpu.vector_store %arg5[%c0_12, %c0_13], %12 {strides = array<i32>} : memref<16x64xf32, #tpu.memory_space<vmem>>, vector<16x64xf32>,
    } else {
    }
    return
  }
  func.func @transform_0(%arg0: i32, %arg1: i32, %arg2: i32) -> (i32, i32) {
    %c0_i32 = arith.constant 0 : i32
    return %arg0, %arg2 : i32, i32
  }
  func.func @transform_1(%arg0: i32, %arg1: i32, %arg2: i32) -> (i32, i32) {
    %c0_i32 = arith.constant 0 : i32
    return %arg2, %arg1 : i32, i32
  }
  func.func @transform_2(%arg0: i32, %arg1: i32, %arg2: i32) -> (i32, i32) {
    %c0_i32 = arith.constant 0 : i32
    return %arg0, %arg1 : i32, i32
  }
}

module attributes {stable_mosaic.version = 11 : i64} {
  func.func @_matmul_kernel(%arg0: i32, %arg1: i32, %arg2: i32, %arg3: memref<16x32xf32, #tpu.memory_space<vmem>>, %arg4: memref<32x32xf32, #tpu.memory_space<vmem>>, %arg5: memref<16x32xf32, #tpu.memory_space<vmem>>, %arg6: memref<16x32xf32, #tpu.memory_space<vmem>>) attributes {dimension_semantics = [#tpu.dimension_semantics<parallel>, #tpu.dimension_semantics<parallel>, #tpu.dimension_semantics<arbitrary>], iteration_bounds = array<i64: 1, 1, 1>, scalar_prefetch = 0 : i64, scratch_operands = 1 : i64, tpu.core_type = #tpu.core_type<tc>, window_params = [{transform_indices = @transform_0, window_bounds = array<i64: 16, 32>}, {transform_indices = @transform_1, window_bounds = array<i64: 32, 32>}, {transform_indices = @transform_2, window_bounds = array<i64: 16, 32>}]} {
    %c0_i32 = arith.constant 0 : i32
    %0 = arith.cmpi eq, %arg2, %c0_i32 : i32
    %1 = arith.extui %0 : i1 to i32
    %c0_i32_0 = arith.constant 0 : i32
    %2 = arith.cmpi ne, %1, %c0_i32_0 : i32
    scf.if %2 {
      %cst_10 = arith.constant 0.000000e+00 : f32
      %12 = vector.broadcast %cst_10 : f32 to vector<16x32xf32>
      %c0_11 = arith.constant 0 : index
      %c0_12 = arith.constant 0 : index
      %13 = vector.load %arg6[%c0_11, %c0_12] : memref<16x32xf32, #tpu.memory_space<vmem>>, vector<16x32xf32>
      tpu.vector_store %arg6[%c0_11, %c0_12], %12 {strides = array<i32>} : memref<16x32xf32, #tpu.memory_space<vmem>>, vector<16x32xf32>,
    } else {
    }
    %c0 = arith.constant 0 : index
    %c0_1 = arith.constant 0 : index
    %3 = vector.load %arg6[%c0, %c0_1] : memref<16x32xf32, #tpu.memory_space<vmem>>, vector<16x32xf32>
    %c0_2 = arith.constant 0 : index
    %c0_3 = arith.constant 0 : index
    %4 = vector.load %arg3[%c0_2, %c0_3] : memref<16x32xf32, #tpu.memory_space<vmem>>, vector<16x32xf32>
    %c0_4 = arith.constant 0 : index
    %c0_5 = arith.constant 0 : index
    %5 = vector.load %arg4[%c0_4, %c0_5] : memref<32x32xf32, #tpu.memory_space<vmem>>, vector<32x32xf32>
    %cst = arith.constant dense<0.000000e+00> : vector<16x32xf32>
    %6 = tpu.matmul %4, %5, %cst {dimension_numbers = #tpu.dot_dimension_numbers<[1], [0], [0], [1], [0, 0, 1, 1], [], []>} : vector<16x32xf32>, vector<32x32xf32>, vector<16x32xf32> -> vector<16x32xf32>
    %7 = arith.addf %3, %6 : vector<16x32xf32>
    %c0_6 = arith.constant 0 : index
    %c0_7 = arith.constant 0 : index
    %8 = vector.load %arg6[%c0_6, %c0_7] : memref<16x32xf32, #tpu.memory_space<vmem>>, vector<16x32xf32>
    tpu.vector_store %arg6[%c0_6, %c0_7], %7 {strides = array<i32>} : memref<16x32xf32, #tpu.memory_space<vmem>>, vector<16x32xf32>,
    %c0_i32_8 = arith.constant 0 : i32
    %9 = arith.cmpi eq, %arg2, %c0_i32_8 : i32
    %10 = arith.extui %9 : i1 to i32
    %c0_i32_9 = arith.constant 0 : i32
    %11 = arith.cmpi ne, %10, %c0_i32_9 : i32
    scf.if %11 {
      %c0_10 = arith.constant 0 : index
      %c0_11 = arith.constant 0 : index
      %12 = vector.load %arg6[%c0_10, %c0_11] : memref<16x32xf32, #tpu.memory_space<vmem>>, vector<16x32xf32>
      %c0_12 = arith.constant 0 : index
      %c0_13 = arith.constant 0 : index
      %13 = vector.load %arg5[%c0_12, %c0_13] : memref<16x32xf32, #tpu.memory_space<vmem>>, vector<16x32xf32>
      tpu.vector_store %arg5[%c0_12, %c0_13], %12 {strides = array<i32>} : memref<16x32xf32, #tpu.memory_space<vmem>>, vector<16x32xf32>,
    } else {
    }
    return
  }
  func.func @transform_0(%arg0: i32, %arg1: i32, %arg2: i32) -> (i32, i32) {
    %c0_i32 = arith.constant 0 : i32
    return %arg0, %arg2 : i32, i32
  }
  func.func @transform_1(%arg0: i32, %arg1: i32, %arg2: i32) -> (i32, i32) {
    %c0_i32 = arith.constant 0 : i32
    return %arg2, %arg1 : i32, i32
  }
  func.func @transform_2(%arg0: i32, %arg1: i32, %arg2: i32) -> (i32, i32) {
    %c0_i32 = arith.constant 0 : i32
    return %arg0, %arg1 : i32, i32
  }
}

module attributes {stable_mosaic.version = 11 : i64} {
  func.func @_flash_attn_kernel(%arg0: i32, %arg1: i32, %arg2: i32, %arg3: i32, %arg4: memref<1x2x8x8xf32, #tpu.memory_space<vmem>>, %arg5: memref<1x1x8x8xf32, #tpu.memory_space<vmem>>, %arg6: memref<1x1x8x8xf32, #tpu.memory_space<vmem>>, %arg7: memref<8x4xf32, #tpu.memory_space<vmem>>, %arg8: memref<8x4xf32, #tpu.memory_space<vmem>>, %arg9: memref<8x4xf32, #tpu.memory_space<vmem>>, %arg10: memref<8x4xf32, #tpu.memory_space<vmem>>, %arg11: memref<1x2x8x8xf32, #tpu.memory_space<vmem>>, %arg12: memref<2x8x8xf32, #tpu.memory_space<vmem>>, %arg13: memref<8x8xf32, #tpu.memory_space<vmem>>, %arg14: memref<2x8x1xf32, #tpu.memory_space<vmem>>, %arg15: memref<2x8x1xf32, #tpu.memory_space<vmem>>, %arg16: memref<2x8x8xf32, #tpu.memory_space<vmem>>) attributes {dimension_semantics = [#tpu.dimension_semantics<parallel>, #tpu.dimension_semantics<parallel>, #tpu.dimension_semantics<parallel>, #tpu.dimension_semantics<arbitrary>], iteration_bounds = array<i64: 2, 2, 1, 1>, scalar_prefetch = 0 : i64, scratch_operands = 5 : i64, tpu.core_type = #tpu.core_type<tc>, window_params = [{transform_indices = @transform_0, window_bounds = array<i64: 1, 2, 8, 8>}, {transform_indices = @transform_1, window_bounds = array<i64: 1, 1, 8, 8>}, {transform_indices = @transform_2, window_bounds = array<i64: 1, 1, 8, 8>}, {transform_indices = @transform_3, window_bounds = array<i64: 8, 4>}, {transform_indices = @transform_4, window_bounds = array<i64: 8, 4>}, {transform_indices = @transform_5, window_bounds = array<i64: 8, 4>}, {transform_indices = @transform_6, window_bounds = array<i64: 8, 4>}, {transform_indices = @transform_7, window_bounds = array<i64: 1, 2, 8, 8>}]} {
    %c8_i32 = arith.constant 8 : i32
    %0 = arith.muli %arg2, %c8_i32 : i32
    %c8_i32_0 = arith.constant 8 : i32
    %1 = arith.muli %arg3, %c8_i32_0 : i32
    %c0_i32 = arith.constant 0 : i32
    %2 = arith.cmpi eq, %arg3, %c0_i32 : i32
    %3 = arith.extui %2 : i1 to i32
    %c0_i32_1 = arith.constant 0 : i32
    %4 = arith.cmpi ne, %3, %c0_i32_1 : i32
    scf.if %4 {
      %cst = arith.constant 0xFF800000 : f32
      %13 = vector.broadcast %cst : f32 to vector<2x8x1xf32>
      %c0 = arith.constant 0 : index
      %c0_6 = arith.constant 0 : index
      %c0_7 = arith.constant 0 : index
      %14 = vector.load %arg14[%c0, %c0_6, %c0_7] : memref<2x8x1xf32, #tpu.memory_space<vmem>>, vector<2x8x1xf32>
      tpu.vector_store %arg14[%c0, %c0_6, %c0_7], %13 {strides = array<i32>} : memref<2x8x1xf32, #tpu.memory_space<vmem>>, vector<2x8x1xf32>,
      %cst_8 = arith.constant 0.000000e+00 : f32
      %15 = vector.broadcast %cst_8 : f32 to vector<2x8x1xf32>
      %c0_9 = arith.constant 0 : index
      %c0_10 = arith.constant 0 : index
      %c0_11 = arith.constant 0 : index
      %16 = vector.load %arg15[%c0_9, %c0_10, %c0_11] : memref<2x8x1xf32, #tpu.memory_space<vmem>>, vector<2x8x1xf32>
      tpu.vector_store %arg15[%c0_9, %c0_10, %c0_11], %15 {strides = array<i32>} : memref<2x8x1xf32, #tpu.memory_space<vmem>>, vector<2x8x1xf32>,
      %cst_12 = arith.constant 0.000000e+00 : f32
      %17 = vector.broadcast %cst_12 : f32 to vector<2x8x8xf32>
      %c0_13 = arith.constant 0 : index
      %c0_14 = arith.constant 0 : index
      %c0_15 = arith.constant 0 : index
      %18 = vector.load %arg16[%c0_13, %c0_14, %c0_15] : memref<2x8x8xf32, #tpu.memory_space<vmem>>, vector<2x8x8xf32>
      tpu.vector_store %arg16[%c0_13, %c0_14, %c0_15], %17 {strides = array<i32>} : memref<2x8x8xf32, #tpu.memory_space<vmem>>, vector<2x8x8xf32>,
      %c0_16 = arith.constant 0 : index
      %c0_17 = arith.constant 0 : index
      %c0_18 = arith.constant 0 : index
      %c0_19 = arith.constant 0 : index
      %19 = vector.load %arg4[%c0_16, %c0_17, %c0_18, %c0_19] : memref<1x2x8x8xf32, #tpu.memory_space<vmem>>, vector<1x2x8x8xf32>
      %20 = vector.shape_cast %19 : vector<1x2x8x8xf32> to vector<2x8x8xf32>
      %21 = vector.extract_strided_slice %20 {offsets = [0, 0, 0], sizes = [2, 8, 4], strides = [1, 1, 1]} : vector<2x8x8xf32> to vector<2x8x4xf32>
      %22 = vector.extract_strided_slice %20 {offsets = [0, 0, 4], sizes = [2, 8, 4], strides = [1, 1, 1]} : vector<2x8x8xf32> to vector<2x8x4xf32>
      %c0_20 = arith.constant 0 : index
      %c0_21 = arith.constant 0 : index
      %23 = vector.load %arg7[%c0_20, %c0_21] : memref<8x4xf32, #tpu.memory_space<vmem>>, vector<8x4xf32>
      %24 = vector.shape_cast %23 : vector<8x4xf32> to vector<1x8x4xf32>
      %c0_22 = arith.constant 0 : index
      %c0_23 = arith.constant 0 : index
      %25 = vector.load %arg8[%c0_22, %c0_23] : memref<8x4xf32, #tpu.memory_space<vmem>>, vector<8x4xf32>
      %26 = vector.shape_cast %25 : vector<8x4xf32> to vector<1x8x4xf32>
      %27 = vector.broadcast %24 : vector<1x8x4xf32> to vector<2x8x4xf32>
      %28 = arith.mulf %21, %27 : vector<2x8x4xf32>
      %29 = vector.broadcast %26 : vector<1x8x4xf32> to vector<2x8x4xf32>
      %30 = arith.mulf %22, %29 : vector<2x8x4xf32>
      %31 = arith.subf %28, %30 : vector<2x8x4xf32>
      %c0_24 = arith.constant 0 : index
      %c0_25 = arith.constant 0 : index
      %c0_26 = arith.constant 0 : index
      %32 = vector.load %arg12[%c0_24, %c0_25, %c0_26] : memref<2x8x8xf32, #tpu.memory_space<vmem>>, vector<2x8x4xf32>
      tpu.vector_store %arg12[%c0_24, %c0_25, %c0_26], %31 {strides = array<i32>} : memref<2x8x8xf32, #tpu.memory_space<vmem>>, vector<2x8x4xf32>,
      %33 = vector.broadcast %26 : vector<1x8x4xf32> to vector<2x8x4xf32>
      %34 = arith.mulf %21, %33 : vector<2x8x4xf32>
      %35 = vector.broadcast %24 : vector<1x8x4xf32> to vector<2x8x4xf32>
      %36 = arith.mulf %22, %35 : vector<2x8x4xf32>
      %37 = arith.addf %34, %36 : vector<2x8x4xf32>
      %c0_27 = arith.constant 0 : index
      %c0_28 = arith.constant 0 : index
      %c4 = arith.constant 4 : index
      %38 = vector.load %arg12[%c0_27, %c0_28, %c4] : memref<2x8x8xf32, #tpu.memory_space<vmem>>, vector<2x8x4xf32>
      tpu.vector_store %arg12[%c0_27, %c0_28, %c4], %37 {strides = array<i32>} : memref<2x8x8xf32, #tpu.memory_space<vmem>>, vector<2x8x4xf32>,
    } else {
    }
    %c8_i32_2 = arith.constant 8 : i32
    %5 = arith.addi %0, %c8_i32_2 : i32
    %c1_i32 = arith.constant 1 : i32
    %6 = arith.subi %5, %c1_i32 : i32
    %7 = arith.cmpi sle, %1, %6 : i32
    %8 = arith.extui %7 : i1 to i32
    %c0_i32_3 = arith.constant 0 : i32
    %9 = arith.cmpi ne, %8, %c0_i32_3 : i32
    scf.if %9 {
      %c0 = arith.constant 0 : index
      %c0_6 = arith.constant 0 : index
      %c0_7 = arith.constant 0 : index
      %c0_8 = arith.constant 0 : index
      %13 = vector.load %arg5[%c0, %c0_6, %c0_7, %c0_8] : memref<1x1x8x8xf32, #tpu.memory_space<vmem>>, vector<1x1x8x8xf32>
      %14 = vector.shape_cast %13 : vector<1x1x8x8xf32> to vector<8x8xf32>
      %15 = vector.extract_strided_slice %14 {offsets = [0, 0], sizes = [8, 4], strides = [1, 1]} : vector<8x8xf32> to vector<8x4xf32>
      %16 = vector.extract_strided_slice %14 {offsets = [0, 4], sizes = [8, 4], strides = [1, 1]} : vector<8x8xf32> to vector<8x4xf32>
      %c0_9 = arith.constant 0 : index
      %c0_10 = arith.constant 0 : index
      %17 = vector.load %arg9[%c0_9, %c0_10] : memref<8x4xf32, #tpu.memory_space<vmem>>, vector<8x4xf32>
      %c0_11 = arith.constant 0 : index
      %c0_12 = arith.constant 0 : index
      %18 = vector.load %arg10[%c0_11, %c0_12] : memref<8x4xf32, #tpu.memory_space<vmem>>, vector<8x4xf32>
      %19 = arith.mulf %15, %17 : vector<8x4xf32>
      %20 = arith.mulf %16, %18 : vector<8x4xf32>
      %21 = arith.subf %19, %20 : vector<8x4xf32>
      %c0_13 = arith.constant 0 : index
      %c0_14 = arith.constant 0 : index
      %22 = vector.load %arg13[%c0_13, %c0_14] : memref<8x8xf32, #tpu.memory_space<vmem>>, vector<8x4xf32>
      tpu.vector_store %arg13[%c0_13, %c0_14], %21 {strides = array<i32>} : memref<8x8xf32, #tpu.memory_space<vmem>>, vector<8x4xf32>,
      %23 = arith.mulf %15, %18 : vector<8x4xf32>
      %24 = arith.mulf %16, %17 : vector<8x4xf32>
      %25 = arith.addf %23, %24 : vector<8x4xf32>
      %c0_15 = arith.constant 0 : index
      %c4 = arith.constant 4 : index
      %26 = vector.load %arg13[%c0_15, %c4] : memref<8x8xf32, #tpu.memory_space<vmem>>, vector<8x4xf32>
      tpu.vector_store %arg13[%c0_15, %c4], %25 {strides = array<i32>} : memref<8x8xf32, #tpu.memory_space<vmem>>, vector<8x4xf32>,
      %c0_16 = arith.constant 0 : index
      %c0_17 = arith.constant 0 : index
      %c0_18 = arith.constant 0 : index
      %27 = vector.load %arg12[%c0_16, %c0_17, %c0_18] : memref<2x8x8xf32, #tpu.memory_space<vmem>>, vector<2x8x8xf32>
      %c0_19 = arith.constant 0 : index
      %c0_20 = arith.constant 0 : index
      %28 = vector.load %arg13[%c0_19, %c0_20] : memref<8x8xf32, #tpu.memory_space<vmem>>, vector<8x8xf32>
      %29 = vector.shape_cast %28 : vector<8x8xf32> to vector<1x8x8xf32>
      %30 = vector.shape_cast %29 : vector<1x8x8xf32> to vector<1x8x8xf32>
      %31 = vector.broadcast %30 : vector<1x8x8xf32> to vector<2x8x8xf32>
      "tpu.trace_start"() <{level = 10 : i32, message = "rqd,rkd->rqk"}> : () -> ()
      %cst = arith.constant dense<0.000000e+00> : vector<2x8x8xf32>
      %32 = tpu.matmul %27, %31, %cst {dimension_numbers = #tpu.dot_dimension_numbers<[2], [2], [1], [1], [0, 0, 0, 1, 1, 1], [0], [0]>} : vector<2x8x8xf32>, vector<2x8x8xf32>, vector<2x8x8xf32> -> vector<2x8x8xf32>
      "tpu.trace_stop"() : () -> ()
      %33 = tpu.iota {dimensions = array<i32: 0>} : vector<8x8xi32>
      %34 = vector.broadcast %0 : i32 to vector<8x8xi32>
      %35 = arith.addi %33, %34 : vector<8x8xi32>
      %36 = tpu.iota {dimensions = array<i32: 1>} : vector<8x8xi32>
      %37 = vector.broadcast %1 : i32 to vector<8x8xi32>
      %38 = arith.addi %36, %37 : vector<8x8xi32>
      %39 = arith.cmpi sle, %38, %35 : vector<8x8xi32>
      %40 = vector.shape_cast %39 : vector<8x8xi1> to vector<1x8x8xi1>
      %cst_21 = arith.constant 0xFF800000 : f32
      %41 = vector.shape_cast %40 : vector<1x8x8xi1> to vector<1x8x8xi1>
      %42 = vector.broadcast %41 : vector<1x8x8xi1> to vector<2x8x8xi1>
      %43 = vector.broadcast %cst_21 : f32 to vector<2x8x8xf32>
      %44 = arith.select %42, %32, %43 : vector<2x8x8xi1>, vector<2x8x8xf32>
      %c0_22 = arith.constant 0 : index
      %c0_23 = arith.constant 0 : index
      %c0_24 = arith.constant 0 : index
      %45 = vector.load %arg14[%c0_22, %c0_23, %c0_24] : memref<2x8x1xf32, #tpu.memory_space<vmem>>, vector<2x8x1xf32>
      %cst_25 = arith.constant dense<0xFF800000> : vector<2x8xf32>
      %46 = vector.multi_reduction <maximumf>, %44, %cst_25 [2] : vector<2x8x8xf32> to vector<2x8xf32>
      %47 = vector.shape_cast %46 : vector<2x8xf32> to vector<2x8x1xf32>
      %48 = arith.maximumf %45, %47 : vector<2x8x1xf32>
      %49 = arith.subf %45, %48 : vector<2x8x1xf32>
      %50 = math.exp %49 : vector<2x8x1xf32>
      %51 = vector.broadcast %48 : vector<2x8x1xf32> to vector<2x8x8xf32>
      %52 = arith.subf %44, %51 : vector<2x8x8xf32>
      %53 = math.exp %52 : vector<2x8x8xf32>
      %c0_26 = arith.constant 0 : index
      %c0_27 = arith.constant 0 : index
      %c0_28 = arith.constant 0 : index
      %54 = vector.load %arg15[%c0_26, %c0_27, %c0_28] : memref<2x8x1xf32, #tpu.memory_space<vmem>>, vector<2x8x1xf32>
      %55 = arith.mulf %50, %54 : vector<2x8x1xf32>
      %cst_29 = arith.constant dense<0.000000e+00> : vector<2x8xf32>
      %56 = vector.multi_reduction <add>, %53, %cst_29 [2] : vector<2x8x8xf32> to vector<2x8xf32>
      %57 = vector.shape_cast %56 : vector<2x8xf32> to vector<2x8x1xf32>
      %58 = arith.addf %55, %57 : vector<2x8x1xf32>
      %c0_30 = arith.constant 0 : index
      %c0_31 = arith.constant 0 : index
      %c0_32 = arith.constant 0 : index
      %59 = vector.load %arg15[%c0_30, %c0_31, %c0_32] : memref<2x8x1xf32, #tpu.memory_space<vmem>>, vector<2x8x1xf32>
      tpu.vector_store %arg15[%c0_30, %c0_31, %c0_32], %58 {strides = array<i32>} : memref<2x8x1xf32, #tpu.memory_space<vmem>>, vector<2x8x1xf32>,
      %c0_33 = arith.constant 0 : index
      %c0_34 = arith.constant 0 : index
      %c0_35 = arith.constant 0 : index
      %c0_36 = arith.constant 0 : index
      %60 = vector.load %arg6[%c0_33, %c0_34, %c0_35, %c0_36] : memref<1x1x8x8xf32, #tpu.memory_space<vmem>>, vector<1x1x8x8xf32>
      %61 = vector.shape_cast %60 : vector<1x1x8x8xf32> to vector<8x8xf32>
      %62 = vector.shape_cast %61 : vector<8x8xf32> to vector<1x8x8xf32>
      %63 = vector.shape_cast %62 : vector<1x8x8xf32> to vector<1x8x8xf32>
      %64 = vector.broadcast %63 : vector<1x8x8xf32> to vector<2x8x8xf32>
      "tpu.trace_start"() <{level = 10 : i32, message = "rqk,rkd->rqd"}> : () -> ()
      %cst_37 = arith.constant dense<0.000000e+00> : vector<2x8x8xf32>
      %65 = tpu.matmul %53, %64, %cst_37 {dimension_numbers = #tpu.dot_dimension_numbers<[2], [1], [1], [2], [0, 0, 0, 1, 1, 2], [0], [0]>} : vector<2x8x8xf32>, vector<2x8x8xf32>, vector<2x8x8xf32> -> vector<2x8x8xf32>
      "tpu.trace_stop"() : () -> ()
      %c0_38 = arith.constant 0 : index
      %c0_39 = arith.constant 0 : index
      %c0_40 = arith.constant 0 : index
      %66 = vector.load %arg16[%c0_38, %c0_39, %c0_40] : memref<2x8x8xf32, #tpu.memory_space<vmem>>, vector<2x8x8xf32>
      %67 = vector.broadcast %50 : vector<2x8x1xf32> to vector<2x8x8xf32>
      %68 = arith.mulf %67, %66 : vector<2x8x8xf32>
      %69 = arith.addf %68, %65 : vector<2x8x8xf32>
      %c0_41 = arith.constant 0 : index
      %c0_42 = arith.constant 0 : index
      %c0_43 = arith.constant 0 : index
      %70 = vector.load %arg16[%c0_41, %c0_42, %c0_43] : memref<2x8x8xf32, #tpu.memory_space<vmem>>, vector<2x8x8xf32>
      tpu.vector_store %arg16[%c0_41, %c0_42, %c0_43], %69 {strides = array<i32>} : memref<2x8x8xf32, #tpu.memory_space<vmem>>, vector<2x8x8xf32>,
      %c0_44 = arith.constant 0 : index
      %c0_45 = arith.constant 0 : index
      %c0_46 = arith.constant 0 : index
      %71 = vector.load %arg14[%c0_44, %c0_45, %c0_46] : memref<2x8x1xf32, #tpu.memory_space<vmem>>, vector<2x8x1xf32>
      tpu.vector_store %arg14[%c0_44, %c0_45, %c0_46], %48 {strides = array<i32>} : memref<2x8x1xf32, #tpu.memory_space<vmem>>, vector<2x8x1xf32>,
    } else {
    }
    %c0_i32_4 = arith.constant 0 : i32
    %10 = arith.cmpi eq, %arg3, %c0_i32_4 : i32
    %11 = arith.extui %10 : i1 to i32
    %c0_i32_5 = arith.constant 0 : i32
    %12 = arith.cmpi ne, %11, %c0_i32_5 : i32
    scf.if %12 {
      %c0 = arith.constant 0 : index
      %c0_6 = arith.constant 0 : index
      %c0_7 = arith.constant 0 : index
      %13 = vector.load %arg15[%c0, %c0_6, %c0_7] : memref<2x8x1xf32, #tpu.memory_space<vmem>>, vector<2x8x1xf32>
      %14 = tpu.reciprocal %13 : vector<2x8x1xf32> -> vector<2x8x1xf32>
      %c0_8 = arith.constant 0 : index
      %c0_9 = arith.constant 0 : index
      %c0_10 = arith.constant 0 : index
      %15 = vector.load %arg16[%c0_8, %c0_9, %c0_10] : memref<2x8x8xf32, #tpu.memory_space<vmem>>, vector<2x8x8xf32>
      %16 = vector.broadcast %14 : vector<2x8x1xf32> to vector<2x8x8xf32>
      %17 = arith.mulf %15, %16 : vector<2x8x8xf32>
      %c0_11 = arith.constant 0 : index
      %c0_12 = arith.constant 0 : index
      %c0_13 = arith.constant 0 : index
      %c0_14 = arith.constant 0 : index
      %18 = vector.load %arg11[%c0_11, %c0_12, %c0_13, %c0_14] : memref<1x2x8x8xf32, #tpu.memory_space<vmem>>, vector<1x2x8x8xf32>
      %19 = vector.shape_cast %18 : vector<1x2x8x8xf32> to vector<2x8x8xf32>
      %20 = vector.shape_cast %17 : vector<2x8x8xf32> to vector<1x2x8x8xf32>
      tpu.vector_store %arg11[%c0_11, %c0_12, %c0_13, %c0_14], %20 {strides = array<i32>} : memref<1x2x8x8xf32, #tpu.memory_space<vmem>>, vector<1x2x8x8xf32>,
    } else {
    }
    return
  }
  func.func @transform_0(%arg0: i32, %arg1: i32, %arg2: i32, %arg3: i32) -> (i32, i32, i32, i32) {
    %c0_i32 = arith.constant 0 : i32
    %c0_i32_0 = arith.constant 0 : i32
    return %arg0, %arg1, %arg2, %c0_i32 : i32, i32, i32, i32
  }
  func.func @transform_1(%arg0: i32, %arg1: i32, %arg2: i32, %arg3: i32) -> (i32, i32, i32, i32) {
    %c0_i32 = arith.constant 0 : i32
    %c0_i32_0 = arith.constant 0 : i32
    return %arg0, %arg1, %arg3, %c0_i32 : i32, i32, i32, i32
  }
  func.func @transform_2(%arg0: i32, %arg1: i32, %arg2: i32, %arg3: i32) -> (i32, i32, i32, i32) {
    %c0_i32 = arith.constant 0 : i32
    %c0_i32_0 = arith.constant 0 : i32
    return %arg0, %arg1, %arg3, %c0_i32 : i32, i32, i32, i32
  }
  func.func @transform_3(%arg0: i32, %arg1: i32, %arg2: i32, %arg3: i32) -> (i32, i32) {
    %c0_i32 = arith.constant 0 : i32
    %c0_i32_0 = arith.constant 0 : i32
    return %arg2, %c0_i32 : i32, i32
  }
  func.func @transform_4(%arg0: i32, %arg1: i32, %arg2: i32, %arg3: i32) -> (i32, i32) {
    %c0_i32 = arith.constant 0 : i32
    %c0_i32_0 = arith.constant 0 : i32
    return %arg2, %c0_i32 : i32, i32
  }
  func.func @transform_5(%arg0: i32, %arg1: i32, %arg2: i32, %arg3: i32) -> (i32, i32) {
    %c0_i32 = arith.constant 0 : i32
    %c0_i32_0 = arith.constant 0 : i32
    return %arg3, %c0_i32 : i32, i32
  }
  func.func @transform_6(%arg0: i32, %arg1: i32, %arg2: i32, %arg3: i32) -> (i32, i32) {
    %c0_i32 = arith.constant 0 : i32
    %c0_i32_0 = arith.constant 0 : i32
    return %arg3, %c0_i32 : i32, i32
  }
  func.func @transform_7(%arg0: i32, %arg1: i32, %arg2: i32, %arg3: i32) -> (i32, i32, i32, i32) {
    %c0_i32 = arith.constant 0 : i32
    %c0_i32_0 = arith.constant 0 : i32
    return %arg0, %arg1, %arg2, %c0_i32 : i32, i32, i32, i32
  }
}

</mosaic_0001>

<llo_original>
// kernel: attention_forward.3
$region0: #{attention_forward.3}
  #allocation0 [shape = 'u32[]', space=smem, size = 0x4, offset = 0x4, fixed_abs, tag = 'smem constant byte address 0x4 - core index']
  #allocation1 [shape = 'u32[144,128]{1,0:T(1,128)}', space=vmem, size = 0x12000, scoped, tag = 'internal scratch']
  #allocation2 [shape = 'f32[16,64]{1,0:T(8,128)}', space=vmem, size = 0x2000, scoped, tag = 'scratch operand']
  %s0 = inlined_call_operand.hbm [shape: f32[16,32], index: 0, kind: input, shape index: {}]
  %s1 = inlined_call_operand.vmem [shape: f32[32,64], index: 1, kind: input, shape index: {}]
  %s2 = inlined_call_operand.vmem [shape: f32[16,64], index: 2, kind: output, shape index: {}]
  %s3 = sld [smem:[#allocation0]]
  $region30: #{attention_forward.3} parent=0
    _
  %s5 = ssub.s32 1, %s3
  %s6 = scalar_select 0, %s5, %s3
  $region1: #{attention_forward.3} parent=0
    #allocation3 [shape = 'u8[8192]{0}', space=vmem, size = 0x2000, scoped, tag = 'input window, operand 0, single buffered']
    #allocation4 [shape = 's32[1]{0}', space=sflag, size = 0x4, scoped, tag = 'scoped memory for attention_forward.3']
    %7 = vsyncpa [#allocation4], 0
    // Predicated region
    $region2: #{attention_forward.3} parent=1 // pred_check
      _
    $region3: #{attention_forward.3} parent=1 // pred_check_branch
      %9 = sbr.rel (0) target = $region5
    $region4: #{attention_forward.3} parent=1 // pred_region
      %s11 = ssub.s32 256, 256
      %12 = vsyncadd [#allocation4], %s11
      %s13 = sshll.u32 [#allocation3], 4
      %s14 = int_to_ptr.vmem [resolvable:$true] %s13
      %19 = dma.hbm_to_vmem [thread:$0]  %s0, 256, %s14, [#allocation4], 128, 128, 8
    $region5: #{attention_forward.3} parent=1 // pred_fallthru
      _
    // Predicated region
    $region6: #{attention_forward.3} parent=1 // pred_check
      _
    $region7: #{attention_forward.3} parent=1 // pred_check_branch
      %21 = sbr.rel (0) target = $region9
    $region8: #{attention_forward.3} parent=1 // pred_region
      _
    $region9: #{attention_forward.3} parent=1 // pred_fallthru
      _
    // Predicated region
    $region10: #{attention_forward.3} parent=1 // pred_check
      _
    $region11: #{attention_forward.3} parent=1 // pred_check_branch
      %23 = sbr.rel (0) target = $region13
    $region12: #{attention_forward.3} parent=1 // pred_region
      %24 = dma.done [#allocation4], 256
    $region13: #{attention_forward.3} parent=1 // pred_fallthru
      _
    %p25 = scmp.eq.s32.totalorder 0, 0
    // Predicated region
    $region14: #{attention_forward.3} parent=1 // pred_check
      %p26 = pneg %p25
    $region15: #{attention_forward.3} parent=1 // pred_check_branch
      %28 = sbr.rel (%p26) target = $region17
    $region16: #{attention_forward.3} parent=1 // pred_region
      %vm29 = vcmask 523264
      %30 = vst.msk [vmem:[#allocation2] sm:$0xff] %vm29, 0.0
      %31 = vst.msk [vmem:[#allocation2 + $0x8] sm:$0xff] %vm29, 0.0
    $region17: #{attention_forward.3} parent=1 // pred_fallthru
      _
    %v32 = vld [vmem:[#allocation2] sm:$0xff]
    %v33 = vld [vmem:[#allocation2 + $0x8] sm:$0xff]
    %v34 = vld [vmem:[#allocation3] sm:$0xff]
    %v35 = vld [vmem:[#allocation3 + $0x8] sm:$0xff]
    %v36 = vld [vmem:[%s1] sm:$0xff]
    %v37 = vld [vmem:[%s1 + $0x8] sm:$0xff]
    %v38 = vld [vmem:[%s1 + $0x10] sm:$0xff]
    %v39 = vld [vmem:[%s1 + $0x18] sm:$0xff]
    %vm40 = vcmask 261120
    %v42 = vsel %vm40, %v34, 0
    %v45 = vsel %vm40, %v35, 0
    %47 = vmatprep.subr.mxu0 0.0
    %48 = vmatpush1.msra.mxu0 %v36
    %49 = vmatprep.subr.mxu0 0.0
    %50 = vmatpush1.msra.mxu0 %v37
    %51 = vmatprep.subr.mxu0 0.0
    %52 = vmatpush1.msra.mxu0 %v38
    %53 = vmatprep.subr.mxu0 0.0
    %54 = vmatpush1.msra.mxu0 %v39
    %55 = vmatprep.subr.mxu0 0.0
    %56 = vmatpush1.msra.mxu0 0.0
    %57 = vmatprep.subr.mxu0 0.0
    %58 = vmatpush1.msra.mxu0 0.0
    %59 = vmatprep.subr.mxu0 0.0
    %60 = vmatpush1.msra.mxu0 0.0
    %61 = vmatprep.subr.mxu0 0.0
    %62 = vmatpush1.msra.mxu0 0.0
    %63 = vmatprep.subr.mxu0 0.0
    %64 = vmatpush1.msra.mxu0 0.0
    %65 = vmatprep.subr.mxu0 0.0
    %66 = vmatpush1.msra.mxu0 0.0
    %67 = vmatprep.subr.mxu0 0.0
    %68 = vmatpush1.msra.mxu0 0.0
    %69 = vmatprep.subr.mxu0 0.0
    %70 = vmatpush1.msra.mxu0 0.0
    %71 = vmatprep.subr.mxu0 0.0
    %72 = vmatpush1.msra.mxu0 0.0
    %73 = vmatprep.subr.mxu0 0.0
    %74 = vmatpush1.msra.mxu0 0.0
    %75 = vmatprep.subr.mxu0 0.0
    %76 = vmatpush1.msra.mxu0 0.0
    %77 = vmatprep.subr.mxu0 0.0
    %78 = vmatpush1.msra.mxu0 0.0
    %79 = vmatprep.subr.mxu0 0.0
    %80 = vmatpush1.msra.mxu0 0.0
    %81 = vmatprep.subr.mxu0 0.0
    %82 = vmatpush1.msra.mxu0 0.0
    %83 = vmatprep.subr.mxu0 0.0
    %84 = vmatpush1.msra.mxu0 0.0
    %85 = vmatprep.subr.mxu0 0.0
    %86 = vmatpush1.msra.mxu0 0.0
    %87 = vmatprep.subr.mxu0 0.0
    %88 = vmatpush1.msra.mxu0 0.0
    %89 = vmatprep.subr.mxu0 0.0
    %90 = vmatpush1.msra.mxu0 0.0
    %91 = vmatprep.subr.mxu0 0.0
    %92 = vmatpush1.msra.mxu0 0.0
    %93 = vmatprep.subr.mxu0 0.0
    %94 = vmatpush1.msra.mxu0 0.0
    %95 = vmatprep.subr.mxu0 0.0
    %96 = vmatpush1.msra.mxu0 0.0
    %97 = vmatprep.subr.mxu0 0.0
    %98 = vmatpush1.msra.mxu0 0.0
    %99 = vmatprep.subr.mxu0 0.0
    %100 = vmatpush1.msra.mxu0 0.0
    %101 = vmatprep.subr.mxu0 0.0
    %102 = vmatpush1.msra.mxu0 0.0
    %103 = vmatprep.subr.mxu0 0.0
    %104 = vmatpush1.msra.mxu0 0.0
    %105 = vmatprep.subr.mxu0 0.0
    %106 = vmatpush1.msra.mxu0 0.0
    %107 = vmatprep.subr.mxu0 0.0
    %108 = vmatpush1.msra.mxu0 0.0
    %109 = vmatprep.subr.mxu0 0.0
    %110 = vmatpush1.msra.mxu0 0.0
    %111 = vmatprep.mubr.f32.mxu0 0.0
    %112 = vmatmul.mubr.f32.gmra.mrb[0].mxu0 %v42
    %v113 = vpop.f32.mrb[0].mxu0
    %v114 = vadd.f32 0.0, %v113
    %v115 = vpop.f32.mrb[0].mxu0
    %116 = vmatprep.mubr.f32.mxu0 0.0
    %117 = vmatmul.mubr.f32.gmra.mrb[0].mxu0 %v45
    %v118 = vpop.f32.mrb[0].mxu0
    %v119 = vadd.f32 0.0, %v118
    %v120 = vpop.f32.mrb[0].mxu0
    %121 = vdwg.mxu0
    %v122 = vadd.f32 %v32, %v114
    %v123 = vadd.f32 %v33, %v119
    %vm124 = vcmask 523264
    %125 = vst.msk [vmem:[#allocation2] sm:$0xff] %vm124, %v122
    %126 = vst.msk [vmem:[#allocation2 + $0x8] sm:$0xff] %vm124, %v123
    // Predicated region
    $region18: #{attention_forward.3} parent=1 // pred_check
      %p127 = pneg %p25
    $region19: #{attention_forward.3} parent=1 // pred_check_branch
      %129 = sbr.rel (%p127) target = $region21
    $region20: #{attention_forward.3} parent=1 // pred_region
      %v130 = vld [vmem:[#allocation2] sm:$0xff]
      %v131 = vld [vmem:[#allocation2 + $0x8] sm:$0xff]
      %132 = vst.msk [vmem:[%s2] sm:$0xff] %vm124, %v130
      %133 = vst.msk [vmem:[%s2 + $0x8] sm:$0xff] %vm124, %v131
    $region21: #{attention_forward.3} parent=1 // pred_fallthru
      _
    // Predicated region
    $region22: #{attention_forward.3} parent=1 // pred_check
      _
    $region23: #{attention_forward.3} parent=1 // pred_check_branch
      %135 = sbr.rel (0) target = $region25
    $region24: #{attention_forward.3} parent=1 // pred_region
      _
    $region25: #{attention_forward.3} parent=1 // pred_fallthru
      _
    // Predicated region
    $region26: #{attention_forward.3} parent=1 // pred_check
      _
    $region27: #{attention_forward.3} parent=1 // pred_check_branch
      %137 = sbr.rel (0) target = $region29
    $region28: #{attention_forward.3} parent=1 // pred_region
      _
    $region29: #{attention_forward.3} parent=1 // pred_fallthru
      _
    %138 = vsyncpa [#allocation4], 1

// kernel: attention_forward.5
$region0: #{attention_forward.5}
  #allocation0 [shape = 'u32[]', space=smem, size = 0x4, offset = 0x4, fixed_abs, tag = 'smem constant byte address 0x4 - core index']
  #allocation1 [shape = 'u32[144,128]{1,0:T(1,128)}', space=vmem, size = 0x12000, scoped, tag = 'internal scratch']
  #allocation2 [shape = 'f32[16,32]{1,0:T(8,128)}', space=vmem, size = 0x2000, scoped, tag = 'scratch operand']
  %s0 = inlined_call_operand.vmem [shape: f32[16,32], index: 0, kind: input, shape index: {}]
  %s1 = inlined_call_operand.vmem [shape: f32[32,32], index: 1, kind: input, shape index: {}]
  %s2 = inlined_call_operand.hbm [shape: f32[16,32], index: 2, kind: output, shape index: {}]
  %s3 = sld [smem:[#allocation0]]
  $region26: #{attention_forward.5} parent=0
    _
  %s5 = ssub.s32 1, %s3
  %s6 = scalar_select 0, %s5, %s3
  $region1: #{attention_forward.5} parent=0
    #allocation3 [shape = 'u8[8192]{0}', space=vmem, size = 0x2000, scoped, tag = 'output window, operand 0, single buffered']
    #allocation4 [shape = 's32[1]{0}', space=sflag, size = 0x4, scoped, tag = 'scoped memory for attention_forward.5']
    %7 = vsyncpa [#allocation4], 0
    // Predicated region
    $region2: #{attention_forward.5} parent=1 // pred_check
      _
    $region3: #{attention_forward.5} parent=1 // pred_check_branch
      %9 = sbr.rel (0) target = $region5
    $region4: #{attention_forward.5} parent=1 // pred_region
      _
    $region5: #{attention_forward.5} parent=1 // pred_fallthru
      _
    // Predicated region
    $region6: #{attention_forward.5} parent=1 // pred_check
      _
    $region7: #{attention_forward.5} parent=1 // pred_check_branch
      %11 = sbr.rel (0) target = $region9
    $region8: #{attention_forward.5} parent=1 // pred_region
      _
    $region9: #{attention_forward.5} parent=1 // pred_fallthru
      _
    %p12 = scmp.eq.s32.totalorder 0, 0
    // Predicated region
    $region10: #{attention_forward.5} parent=1 // pred_check
      %p13 = pneg %p12
    $region11: #{attention_forward.5} parent=1 // pred_check_branch
      %15 = sbr.rel (%p13) target = $region13
    $region12: #{attention_forward.5} parent=1 // pred_region
      %vm16 = vcmask 261120
      %17 = vst.msk [vmem:[#allocation2] sm:$0xff] %vm16, 0.0
      %18 = vst.msk [vmem:[#allocation2 + $0x8] sm:$0xff] %vm16, 0.0
    $region13: #{attention_forward.5} parent=1 // pred_fallthru
      _
    %v19 = vld [vmem:[#allocation2] sm:$0xff]
    %v20 = vld [vmem:[#allocation2 + $0x8] sm:$0xff]
    %v21 = vld [vmem:[%s0] sm:$0xff]
    %v22 = vld [vmem:[%s0 + $0x8] sm:$0xff]
    %v23 = vld [vmem:[%s1] sm:$0xff]
    %v24 = vld [vmem:[%s1 + $0x8] sm:$0xff]
    %v25 = vld [vmem:[%s1 + $0x10] sm:$0xff]
    %v26 = vld [vmem:[%s1 + $0x18] sm:$0xff]
    %vm27 = vcmask 261120
    %v29 = vsel %vm27, %v21, 0
    %v32 = vsel %vm27, %v22, 0
    %34 = vmatprep.subr.mxu0 0.0
    %35 = vmatpush1.msra.mxu0 %v23
    %36 = vmatprep.subr.mxu0 0.0
    %37 = vmatpush1.msra.mxu0 %v24
    %38 = vmatprep.subr.mxu0 0.0
    %39 = vmatpush1.msra.mxu0 %v25
    %40 = vmatprep.subr.mxu0 0.0
    %41 = vmatpush1.msra.mxu0 %v26
    %42 = vmatprep.subr.mxu0 0.0
    %43 = vmatpush1.msra.mxu0 0.0
    %44 = vmatprep.subr.mxu0 0.0
    %45 = vmatpush1.msra.mxu0 0.0
    %46 = vmatprep.subr.mxu0 0.0
    %47 = vmatpush1.msra.mxu0 0.0
    %48 = vmatprep.subr.mxu0 0.0
    %49 = vmatpush1.msra.mxu0 0.0
    %50 = vmatprep.subr.mxu0 0.0
    %51 = vmatpush1.msra.mxu0 0.0
    %52 = vmatprep.subr.mxu0 0.0
    %53 = vmatpush1.msra.mxu0 0.0
    %54 = vmatprep.subr.mxu0 0.0
    %55 = vmatpush1.msra.mxu0 0.0
    %56 = vmatprep.subr.mxu0 0.0
    %57 = vmatpush1.msra.mxu0 0.0
    %58 = vmatprep.subr.mxu0 0.0
    %59 = vmatpush1.msra.mxu0 0.0
    %60 = vmatprep.subr.mxu0 0.0
    %61 = vmatpush1.msra.mxu0 0.0
    %62 = vmatprep.subr.mxu0 0.0
    %63 = vmatpush1.msra.mxu0 0.0
    %64 = vmatprep.subr.mxu0 0.0
    %65 = vmatpush1.msra.mxu0 0.0
    %66 = vmatprep.subr.mxu0 0.0
    %67 = vmatpush1.msra.mxu0 0.0
    %68 = vmatprep.subr.mxu0 0.0
    %69 = vmatpush1.msra.mxu0 0.0
    %70 = vmatprep.subr.mxu0 0.0
    %71 = vmatpush1.msra.mxu0 0.0
    %72 = vmatprep.subr.mxu0 0.0
    %73 = vmatpush1.msra.mxu0 0.0
    %74 = vmatprep.subr.mxu0 0.0
    %75 = vmatpush1.msra.mxu0 0.0
    %76 = vmatprep.subr.mxu0 0.0
    %77 = vmatpush1.msra.mxu0 0.0
    %78 = vmatprep.subr.mxu0 0.0
    %79 = vmatpush1.msra.mxu0 0.0
    %80 = vmatprep.subr.mxu0 0.0
    %81 = vmatpush1.msra.mxu0 0.0
    %82 = vmatprep.subr.mxu0 0.0
    %83 = vmatpush1.msra.mxu0 0.0
    %84 = vmatprep.subr.mxu0 0.0
    %85 = vmatpush1.msra.mxu0 0.0
    %86 = vmatprep.subr.mxu0 0.0
    %87 = vmatpush1.msra.mxu0 0.0
    %88 = vmatprep.subr.mxu0 0.0
    %89 = vmatpush1.msra.mxu0 0.0
    %90 = vmatprep.subr.mxu0 0.0
    %91 = vmatpush1.msra.mxu0 0.0
    %92 = vmatprep.subr.mxu0 0.0
    %93 = vmatpush1.msra.mxu0 0.0
    %94 = vmatprep.subr.mxu0 0.0
    %95 = vmatpush1.msra.mxu0 0.0
    %96 = vmatprep.subr.mxu0 0.0
    %97 = vmatpush1.msra.mxu0 0.0
    %98 = vmatprep.mubr.f32.mxu0 0.0
    %99 = vmatmul.mubr.f32.gmra.mrb[0].mxu0 %v29
    %v100 = vpop.f32.mrb[0].mxu0
    %v101 = vadd.f32 0.0, %v100
    %v102 = vpop.f32.mrb[0].mxu0
    %103 = vmatprep.mubr.f32.mxu0 0.0
    %104 = vmatmul.mubr.f32.gmra.mrb[0].mxu0 %v32
    %v105 = vpop.f32.mrb[0].mxu0
    %v106 = vadd.f32 0.0, %v105
    %v107 = vpop.f32.mrb[0].mxu0
    %108 = vdwg.mxu0
    %v109 = vadd.f32 %v19, %v101
    %v110 = vadd.f32 %v20, %v106
    %111 = vst.msk [vmem:[#allocation2] sm:$0xff] %vm27, %v109
    %112 = vst.msk [vmem:[#allocation2 + $0x8] sm:$0xff] %vm27, %v110
    // Predicated region
    $region14: #{attention_forward.5} parent=1 // pred_check
      %p113 = pneg %p12
    $region15: #{attention_forward.5} parent=1 // pred_check_branch
      %115 = sbr.rel (%p113) target = $region17
    $region16: #{attention_forward.5} parent=1 // pred_region
      %v116 = vld [vmem:[#allocation2] sm:$0xff]
      %v117 = vld [vmem:[#allocation2 + $0x8] sm:$0xff]
      %118 = vst.msk [vmem:[#allocation3] sm:$0xff] %vm27, %v116
      %119 = vst.msk [vmem:[#allocation3 + $0x8] sm:$0xff] %vm27, %v117
    $region17: #{attention_forward.5} parent=1 // pred_fallthru
      _
    // Predicated region
    $region18: #{attention_forward.5} parent=1 // pred_check
      _
    $region19: #{attention_forward.5} parent=1 // pred_check_branch
      %121 = sbr.rel (0) target = $region21
    $region20: #{attention_forward.5} parent=1 // pred_region
      %s123 = ssub.s32 256, 256
      %124 = vsyncadd [#allocation4], %s123
      %s125 = sshll.u32 [#allocation3], 4
      %s126 = int_to_ptr.vmem [resolvable:$true] %s125
      %131 = dma.vmem_to_hbm [thread:$0]  %s126, 256, %s2, [#allocation4], 128, 128, 8
    $region21: #{attention_forward.5} parent=1 // pred_fallthru
      _
    // Predicated region
    $region22: #{attention_forward.5} parent=1 // pred_check
      _
    $region23: #{attention_forward.5} parent=1 // pred_check_branch
      %133 = sbr.rel (0) target = $region25
    $region24: #{attention_forward.5} parent=1 // pred_region
      %134 = dma.done [#allocation4], 256
    $region25: #{attention_forward.5} parent=1 // pred_fallthru
      _
    %135 = vsyncpa [#allocation4], 1

// kernel: attention_forward.4
$region0: #{attention_forward.4}
  #allocation0 [shape = 'u32[]', space=smem, size = 0x4, offset = 0x4, fixed_abs, tag = 'smem constant byte address 0x4 - core index']
  #allocation1 [shape = 'u32[144,128]{1,0:T(1,128)}', space=vmem, size = 0x12000, scoped, tag = 'internal scratch']
  #allocation2 [shape = 'f32[2,8,8]{2,1,0:T(8,128)}', space=vmem, size = 0x2000, scoped, tag = 'scratch operand']
  #allocation3 [shape = 'f32[8,8]{1,0:T(8,128)}', space=vmem, size = 0x1000, scoped, tag = 'scratch operand']
  #allocation4 [shape = 'f32[2,8,1]{2,1,0:T(8,128)}', space=vmem, size = 0x2000, scoped, tag = 'scratch operand']
  #allocation5 [shape = 'f32[2,8,1]{2,1,0:T(8,128)}', space=vmem, size = 0x2000, scoped, tag = 'scratch operand']
  #allocation6 [shape = 'f32[2,8,8]{2,1,0:T(8,128)}', space=vmem, size = 0x2000, scoped, tag = 'scratch operand']
  %s0 = inlined_call_operand.vmem [shape: f32[2,4,8,8], index: 0, kind: input, shape index: {}]
  %s1 = inlined_call_operand.vmem [shape: f32[2,2,8,8], index: 1, kind: input, shape index: {}]
  %s2 = inlined_call_operand.vmem [shape: f32[2,2,8,8], index: 2, kind: input, shape index: {}]
  %s3 = inlined_call_operand.vmem [shape: f32[8,4], index: 3, kind: input, shape index: {}]
  %s4 = inlined_call_operand.vmem [shape: f32[8,4], index: 4, kind: input, shape index: {}]
  %s5 = inlined_call_operand.vmem [shape: f32[8,4], index: 5, kind: input, shape index: {}]
  %s6 = inlined_call_operand.vmem [shape: f32[8,4], index: 6, kind: input, shape index: {}]
  %s7 = inlined_call_operand.vmem [shape: f32[2,4,8,8], index: 7, kind: output, shape index: {}]
  %s8 = sld [smem:[#allocation0]]
  $region73: #{attention_forward.4} parent=0
    _
  %s10 = ssub.s32 1, %s8
  %s11 = scalar_select 0, %s10, %s8
  loop: start=0, step=1, limit=6
  $region2: #{attention_forward.4} parent=0 // loop_pre_header
    _
  $region3: #{attention_forward.4} parent=0 // loop_header
    %s13 = sphi 0, %s17
    %p14 = scmp.ge.s32.totalorder %s13, 6
    %s20 = sphi 0, %s46
    %s21 = sphi 0, %s42
    %s22 = sphi 0, %s38
    %s23 = sphi 0, %s34
    %s24 = sphi 0, %s20
    %s25 = sphi 0, %s21
    %s26 = sphi 0, %s22
    %s27 = sphi 0, %s23
    %s28 = sphi 0, %s24
    %s29 = sphi 0, %s25
    %s30 = sphi 0, %s26
    %s31 = sphi 0, %s27
    %s53 = sphi 0, %s55
    %s56 = sphi 0, %s53
    %s57 = sphi 0, %s56
    %s73 = sphi 0, %s57
    %s83 = sphi 0, %s85
    %s86 = sphi 0, %s83
    %s87 = sphi 0, %s86
    %s103 = sphi 0, %s87
    %s113 = sphi 0, %s115
    %s116 = sphi 0, %s113
    %s117 = sphi 0, %s116
    %s133 = sphi 0, %s117
    %s139 = sphi 0, %s141
    %s142 = sphi 0, %s139
    %s143 = sphi 0, %s142
    %s159 = sphi 0, %s143
    %s165 = sphi 0, %s167
    %s168 = sphi 0, %s165
    %s169 = sphi 0, %s168
    %s185 = sphi 0, %s169
    %s191 = sphi 0, %s193
    %s194 = sphi 0, %s191
    %s195 = sphi 0, %s194
    %s211 = sphi 0, %s195
    %s217 = sphi 0, %s219
    %s220 = sphi 0, %s217
    %s221 = sphi 0, %s220
    %s237 = sphi 0, %s221
    %s247 = sphi 0, %s249
    %s250 = sphi 0, %s247
    %s251 = sphi 0, %s250
    %s267 = sphi 0, %s251
  $region4: #{attention_forward.4} parent=0 // loop_header_branch
    %16 = sbr.rel (%p14) target = $region8
  $region5: #{attention_forward.4} parent=0 // loop_body
    %s18 = ssub.s32 %s13, 1
    %s19 = ssub.s32 %s13, 2
    %s32 = sadd.s32 1, %s23
    %p33 = scmp.ge.s32.totalorder %s32, 1
    %s34 = scalar_select %p33, 0, %s32
    %s35 = sadd.s32 1, %s22
    %s36 = scalar_select %p33, %s35, %s22
    %p37 = scmp.ge.s32.totalorder %s36, 1
    %s38 = scalar_select %p37, 0, %s36
    %s39 = sadd.s32 1, %s21
    %s40 = scalar_select %p37, %s39, %s21
    %p41 = scmp.ge.s32.totalorder %s40, 2
    %s42 = scalar_select %p41, 0, %s40
    %s43 = sadd.s32 1, %s20
    %s44 = scalar_select %p41, %s43, %s20
    %p45 = scmp.ge.s32.totalorder %s44, 2
    %s46 = scalar_select %p45, 0, %s44
    %s47 = ssub.s32 %s20, %s46
    %s48 = ssub.s32 %s21, %s42
    %s49 = sor.u32 %s47, %s48
    %s50 = ssub.s32 %s22, %s38
    %s51 = sor.u32 %s49, %s50
    %p52 = scmp.eq.s32.totalorder %s51, 0
    %s54 = sadd.s32 %s53, 1
    %s55 = scalar_select %p52, %s53, %s54
    %p58 = pneg %p52
    %p59 = scmp.eq.s32.totalorder %s13, 3
    %p60 = por %p58, %p59
    %p61 = scmp.ne.s32.totalorder %s53, %s56
    %p62 = scmp.eq.s32.totalorder %s13, 0
    %p63 = por %p61, %p62
    %p64 = scmp.ne.s32.totalorder %s53, %s56
    %p65 = scmp.eq.s32.totalorder %s18, 3
    %p66 = por %p64, %p65
    %p67 = scmp.ne.s32.totalorder %s56, %s57
    %p68 = scmp.eq.s32.totalorder %s18, 0
    %p69 = por %p67, %p68
    %p70 = scmp.ne.s32.totalorder %s56, %s57
    %p71 = scmp.eq.s32.totalorder %s19, 3
    %p72 = por %p70, %p71
    %p74 = scmp.ne.s32.totalorder %s57, %s73
    %p75 = scmp.eq.s32.totalorder %s19, 0
    %p76 = por %p74, %p75
    %s77 = ssub.s32 %s20, %s46
    %s78 = ssub.s32 %s21, %s42
    %s79 = sor.u32 %s77, %s78
    %s80 = ssub.s32 %s23, %s34
    %s81 = sor.u32 %s79, %s80
    %p82 = scmp.eq.s32.totalorder %s81, 0
    %s84 = sadd.s32 %s83, 1
    %s85 = scalar_select %p82, %s83, %s84
    %p88 = pneg %p82
    %p89 = scmp.eq.s32.totalorder %s13, 3
    %p90 = por %p88, %p89
    %p91 = scmp.ne.s32.totalorder %s83, %s86
    %p92 = scmp.eq.s32.totalorder %s13, 0
    %p93 = por %p91, %p92
    %p94 = scmp.ne.s32.totalorder %s83, %s86
    %p95 = scmp.eq.s32.totalorder %s18, 3
    %p96 = por %p94, %p95
    %p97 = scmp.ne.s32.totalorder %s86, %s87
    %p98 = scmp.eq.s32.totalorder %s18, 0
    %p99 = por %p97, %p98
    %p100 = scmp.ne.s32.totalorder %s86, %s87
    %p101 = scmp.eq.s32.totalorder %s19, 3
    %p102 = por %p100, %p101
    %p104 = scmp.ne.s32.totalorder %s87, %s103
    %p105 = scmp.eq.s32.totalorder %s19, 0
    %p106 = por %p104, %p105
    %s107 = ssub.s32 %s20, %s46
    %s108 = ssub.s32 %s21, %s42
    %s109 = sor.u32 %s107, %s108
    %s110 = ssub.s32 %s23, %s34
    %s111 = sor.u32 %s109, %s110
    %p112 = scmp.eq.s32.totalorder %s111, 0
    %s114 = sadd.s32 %s113, 1
    %s115 = scalar_select %p112, %s113, %s114
    %p118 = pneg %p112
    %p119 = scmp.eq.s32.totalorder %s13, 3
    %p120 = por %p118, %p119
    %p121 = scmp.ne.s32.totalorder %s113, %s116
    %p122 = scmp.eq.s32.totalorder %s13, 0
    %p123 = por %p121, %p122
    %p124 = scmp.ne.s32.totalorder %s113, %s116
    %p125 = scmp.eq.s32.totalorder %s18, 3
    %p126 = por %p124, %p125
    %p127 = scmp.ne.s32.totalorder %s116, %s117
    %p128 = scmp.eq.s32.totalorder %s18, 0
    %p129 = por %p127, %p128
    %p130 = scmp.ne.s32.totalorder %s116, %s117
    %p131 = scmp.eq.s32.totalorder %s19, 3
    %p132 = por %p130, %p131
    %p134 = scmp.ne.s32.totalorder %s117, %s133
    %p135 = scmp.eq.s32.totalorder %s19, 0
    %p136 = por %p134, %p135
    %s137 = ssub.s32 %s22, %s38
    %p138 = scmp.eq.s32.totalorder %s137, 0
    %s140 = sadd.s32 %s139, 1
    %s141 = scalar_select %p138, %s139, %s140
    %p144 = pneg %p138
    %p145 = scmp.eq.s32.totalorder %s13, 3
    %p146 = por %p144, %p145
    %p147 = scmp.ne.s32.totalorder %s139, %s142
    %p148 = scmp.eq.s32.totalorder %s13, 0
    %p149 = por %p147, %p148
    %p150 = scmp.ne.s32.totalorder %s139, %s142
    %p151 = scmp.eq.s32.totalorder %s18, 3
    %p152 = por %p150, %p151
    %p153 = scmp.ne.s32.totalorder %s142, %s143
    %p154 = scmp.eq.s32.totalorder %s18, 0
    %p155 = por %p153, %p154
    %p156 = scmp.ne.s32.totalorder %s142, %s143
    %p157 = scmp.eq.s32.totalorder %s19, 3
    %p158 = por %p156, %p157
    %p160 = scmp.ne.s32.totalorder %s143, %s159
    %p161 = scmp.eq.s32.totalorder %s19, 0
    %p162 = por %p160, %p161
    %s163 = ssub.s32 %s22, %s38
    %p164 = scmp.eq.s32.totalorder %s163, 0
    %s166 = sadd.s32 %s165, 1
    %s167 = scalar_select %p164, %s165, %s166
    %p170 = pneg %p164
    %p171 = scmp.eq.s32.totalorder %s13, 3
    %p172 = por %p170, %p171
    %p173 = scmp.ne.s32.totalorder %s165, %s168
    %p174 = scmp.eq.s32.totalorder %s13, 0
    %p175 = por %p173, %p174
    %p176 = scmp.ne.s32.totalorder %s165, %s168
    %p177 = scmp.eq.s32.totalorder %s18, 3
    %p178 = por %p176, %p177
    %p179 = scmp.ne.s32.totalorder %s168, %s169
    %p180 = scmp.eq.s32.totalorder %s18, 0
    %p181 = por %p179, %p180
    %p182 = scmp.ne.s32.totalorder %s168, %s169
    %p183 = scmp.eq.s32.totalorder %s19, 3
    %p184 = por %p182, %p183
    %p186 = scmp.ne.s32.totalorder %s169, %s185
    %p187 = scmp.eq.s32.totalorder %s19, 0
    %p188 = por %p186, %p187
    %s189 = ssub.s32 %s23, %s34
    %p190 = scmp.eq.s32.totalorder %s189, 0
    %s192 = sadd.s32 %s191, 1
    %s193 = scalar_select %p190, %s191, %s192
    %p196 = pneg %p190
    %p197 = scmp.eq.s32.totalorder %s13, 3
    %p198 = por %p196, %p197
    %p199 = scmp.ne.s32.totalorder %s191, %s194
    %p200 = scmp.eq.s32.totalorder %s13, 0
    %p201 = por %p199, %p200
    %p202 = scmp.ne.s32.totalorder %s191, %s194
    %p203 = scmp.eq.s32.totalorder %s18, 3
    %p204 = por %p202, %p203
    %p205 = scmp.ne.s32.totalorder %s194, %s195
    %p206 = scmp.eq.s32.totalorder %s18, 0
    %p207 = por %p205, %p206
    %p208 = scmp.ne.s32.totalorder %s194, %s195
    %p209 = scmp.eq.s32.totalorder %s19, 3
    %p210 = por %p208, %p209
    %p212 = scmp.ne.s32.totalorder %s195, %s211
    %p213 = scmp.eq.s32.totalorder %s19, 0
    %p214 = por %p212, %p213
    %s215 = ssub.s32 %s23, %s34
    %p216 = scmp.eq.s32.totalorder %s215, 0
    %s218 = sadd.s32 %s217, 1
    %s219 = scalar_select %p216, %s217, %s218
    %p222 = pneg %p216
    %p223 = scmp.eq.s32.totalorder %s13, 3
    %p224 = por %p222, %p223
    %p225 = scmp.ne.s32.totalorder %s217, %s220
    %p226 = scmp.eq.s32.totalorder %s13, 0
    %p227 = por %p225, %p226
    %p228 = scmp.ne.s32.totalorder %s217, %s220
    %p229 = scmp.eq.s32.totalorder %s18, 3
    %p230 = por %p228, %p229
    %p231 = scmp.ne.s32.totalorder %s220, %s221
    %p232 = scmp.eq.s32.totalorder %s18, 0
    %p233 = por %p231, %p232
    %p234 = scmp.ne.s32.totalorder %s220, %s221
    %p235 = scmp.eq.s32.totalorder %s19, 3
    %p236 = por %p234, %p235
    %p238 = scmp.ne.s32.totalorder %s221, %s237
    %p239 = scmp.eq.s32.totalorder %s19, 0
    %p240 = por %p238, %p239
    %s241 = ssub.s32 %s20, %s46
    %s242 = ssub.s32 %s21, %s42
    %s243 = sor.u32 %s241, %s242
    %s244 = ssub.s32 %s22, %s38
    %s245 = sor.u32 %s243, %s244
    %p246 = scmp.eq.s32.totalorder %s245, 0
    %s248 = sadd.s32 %s247, 1
    %s249 = scalar_select %p246, %s247, %s248
    %p252 = pneg %p246
    %p253 = scmp.eq.s32.totalorder %s13, 3
    %p254 = por %p252, %p253
    %p255 = scmp.ne.s32.totalorder %s247, %s250
    %p256 = scmp.eq.s32.totalorder %s13, 0
    %p257 = por %p255, %p256
    %p258 = scmp.ne.s32.totalorder %s247, %s250
    %p259 = scmp.eq.s32.totalorder %s18, 3
    %p260 = por %p258, %p259
    %p261 = scmp.ne.s32.totalorder %s250, %s251
    %p262 = scmp.eq.s32.totalorder %s18, 0
    %p263 = por %p261, %p262
    %p264 = scmp.ne.s32.totalorder %s250, %s251
    %p265 = scmp.eq.s32.totalorder %s19, 3
    %p266 = por %p264, %p265
    %p268 = scmp.ne.s32.totalorder %s251, %s267
    %p269 = scmp.eq.s32.totalorder %s19, 0
    %p270 = por %p268, %p269
    %p271 = scmp.le.s32.totalorder 1, %s13
    %p272 = scmp.lt.s32.totalorder %s13, 5
    %p273 = pnand %p271, %p272
    %p274 = pneg %p273
    // Predicated region
    $region9: #{attention_forward.4} parent=5 // pred_check
      _
    $region10: #{attention_forward.4} parent=5 // pred_check_branch
      %276 = sbr.rel (%p273) target = $region12
    $region11: #{attention_forward.4} parent=5 // pred_region
      %s277 = ssub.s32 %s13, 1
      // Predicated region
      $region13: #{attention_forward.4} parent=11 // pred_check
        %p278 = pneg %p155
      $region14: #{attention_forward.4} parent=11 // pred_check_branch
        %280 = sbr.rel (%p278) target = $region16
      $region15: #{attention_forward.4} parent=11 // pred_region
        %p281 = scmp.lt.s32.totalorder %s26, 0
        %s282 = scalar_select %p281, %s26, 0
        %s283 = smul.addr %s282, 8
        %s284 = scalar_lea.vmem %s3, %s283
      $region16: #{attention_forward.4} parent=11 // pred_fallthru
        _
      // Predicated region
      $region17: #{attention_forward.4} parent=11 // pred_check
        %p285 = pneg %p181
      $region18: #{attention_forward.4} parent=11 // pred_check_branch
        %287 = sbr.rel (%p285) target = $region20
      $region19: #{attention_forward.4} parent=11 // pred_region
        %p288 = scmp.lt.s32.totalorder %s26, 0
        %s289 = scalar_select %p288, %s26, 0
        %s290 = smul.addr %s289, 8
        %s291 = scalar_lea.vmem %s4, %s290
      $region20: #{attention_forward.4} parent=11 // pred_fallthru
        _
      // Predicated region
      $region21: #{attention_forward.4} parent=11 // pred_check
        %p292 = pneg %p207
      $region22: #{attention_forward.4} parent=11 // pred_check_branch
        %294 = sbr.rel (%p292) target = $region24
      $region23: #{attention_forward.4} parent=11 // pred_region
        %p295 = scmp.lt.s32.totalorder %s27, 0
        %s296 = scalar_select %p295, %s27, 0
        %s297 = smul.addr %s296, 8
        %s298 = scalar_lea.vmem %s5, %s297
      $region24: #{attention_forward.4} parent=11 // pred_fallthru
        _
      // Predicated region
      $region25: #{attention_forward.4} parent=11 // pred_check
        %p299 = pneg %p233
      $region26: #{attention_forward.4} parent=11 // pred_check_branch
        %301 = sbr.rel (%p299) target = $region28
      $region27: #{attention_forward.4} parent=11 // pred_region
        %p302 = scmp.lt.s32.totalorder %s27, 0
        %s303 = scalar_select %p302, %s27, 0
        %s304 = smul.addr %s303, 8
        %s305 = scalar_lea.vmem %s6, %s304
      $region28: #{attention_forward.4} parent=11 // pred_fallthru
        _
    $region12: #{attention_forward.4} parent=5 // pred_fallthru
      _
    %p306 = scmp.lt.s32.totalorder %s13, 4
    // Predicated region
    $region29: #{attention_forward.4} parent=5 // pred_check
      %p307 = pneg %p306
    $region30: #{attention_forward.4} parent=5 // pred_check_branch
      %309 = sbr.rel (%p307) target = $region32
    $region31: #{attention_forward.4} parent=5 // pred_region
      // Predicated region
      $region33: #{attention_forward.4} parent=31 // pred_check
        %p310 = pneg %p63
      $region34: #{attention_forward.4} parent=31 // pred_check_branch
        %312 = sbr.rel (%p310) target = $region36
      $region35: #{attention_forward.4} parent=31 // pred_region
        %s313 = smul.u32 2, %s21
        %p314 = scmp.lt.s32.totalorder %s20, 1
        %s315 = scalar_select %p314, %s20, 1
        %p316 = scmp.lt.s32.totalorder %s313, 3
        %s317 = scalar_select %p316, %s313, 3
        %p318 = scmp.lt.s32.totalorder %s22, 0
        %s319 = scalar_select %p318, %s22, 0
        %s320 = sadd.s32 %s319, %s317
        %s321 = smul.addr %s315, 4
        %s322 = sadd.s32 %s320, %s321
        %s323 = smul.addr %s322, 8
        %s324 = scalar_lea.vmem %s0, %s323
        %s325 = smul.u32 2, %s21
      $region36: #{attention_forward.4} parent=31 // pred_fallthru
        _
      // Predicated region
      $region37: #{attention_forward.4} parent=31 // pred_check
        %p326 = pneg %p93
      $region38: #{attention_forward.4} parent=31 // pred_check_branch
        %328 = sbr.rel (%p326) target = $region40
      $region39: #{attention_forward.4} parent=31 // pred_region
        %p329 = scmp.lt.s32.totalorder %s20, 1
        %s330 = scalar_select %p329, %s20, 1
        %p331 = scmp.lt.s32.totalorder %s21, 1
        %s332 = scalar_select %p331, %s21, 1
        %p333 = scmp.lt.s32.totalorder %s23, 0
        %s334 = scalar_select %p333, %s23, 0
        %s335 = sadd.s32 %s334, %s332
        %s336 = smul.addr %s330, 2
        %s337 = sadd.s32 %s335, %s336
        %s338 = smul.addr %s337, 8
        %s339 = scalar_lea.vmem %s1, %s338
      $region40: #{attention_forward.4} parent=31 // pred_fallthru
        _
      // Predicated region
      $region41: #{attention_forward.4} parent=31 // pred_check
        %p340 = pneg %p123
      $region42: #{attention_forward.4} parent=31 // pred_check_branch
        %342 = sbr.rel (%p340) target = $region44
      $region43: #{attention_forward.4} parent=31 // pred_region
        %p343 = scmp.lt.s32.totalorder %s20, 1
        %s344 = scalar_select %p343, %s20, 1
        %p345 = scmp.lt.s32.totalorder %s21, 1
        %s346 = scalar_select %p345, %s21, 1
        %p347 = scmp.lt.s32.totalorder %s23, 0
        %s348 = scalar_select %p347, %s23, 0
        %s349 = sadd.s32 %s348, %s346
        %s350 = smul.addr %s344, 2
        %s351 = sadd.s32 %s349, %s350
        %s352 = smul.addr %s351, 8
        %s353 = scalar_lea.vmem %s2, %s352
      $region44: #{attention_forward.4} parent=31 // pred_fallthru
        _
    $region32: #{attention_forward.4} parent=5 // pred_fallthru
      _
    %p354 = scmp.le.s32.totalorder 1, %s13
    %p355 = scmp.lt.s32.totalorder %s13, 5
    %p356 = pnand %p354, %p355
    %p357 = pneg %p356
    // Predicated region
    $region45: #{attention_forward.4} parent=5 // pred_check
      _
    $region46: #{attention_forward.4} parent=5 // pred_check_branch
      %359 = sbr.rel (%p356) target = $region48
    $region47: #{attention_forward.4} parent=5 // pred_region
      %s360 = ssub.s32 %s13, 1
      %s361 = smul.u32 2, %s25
      %p362 = scmp.lt.s32.totalorder %s24, 1
      %s363 = scalar_select %p362, %s24, 1
      %p364 = scmp.lt.s32.totalorder %s361, 3
      %s365 = scalar_select %p364, %s361, 3
      %p366 = scmp.lt.s32.totalorder %s26, 0
      %s367 = scalar_select %p366, %s26, 0
      %s368 = sadd.s32 %s367, %s365
      %s369 = smul.addr %s363, 4
      %s370 = sadd.s32 %s368, %s369
      %s371 = smul.addr %s370, 8
      %s372 = scalar_lea.vmem %s0, %s371
      %p373 = pneg %p69
      %p374 = pneg %p66
      %p375 = scmp.lt.s32.totalorder %s24, 1
      %s376 = scalar_select %p375, %s24, 1
      %p377 = scmp.lt.s32.totalorder %s25, 1
      %s378 = scalar_select %p377, %s25, 1
      %p379 = scmp.lt.s32.totalorder %s27, 0
      %s380 = scalar_select %p379, %s27, 0
      %s381 = sadd.s32 %s380, %s378
      %s382 = smul.addr %s376, 2
      %s383 = sadd.s32 %s381, %s382
      %s384 = smul.addr %s383, 8
      %s385 = scalar_lea.vmem %s1, %s384
      %p386 = pneg %p99
      %p387 = pneg %p96
      %p388 = scmp.lt.s32.totalorder %s24, 1
      %s389 = scalar_select %p388, %s24, 1
      %p390 = scmp.lt.s32.totalorder %s25, 1
      %s391 = scalar_select %p390, %s25, 1
      %p392 = scmp.lt.s32.totalorder %s27, 0
      %s393 = scalar_select %p392, %s27, 0
      %s394 = sadd.s32 %s393, %s391
      %s395 = smul.addr %s389, 2
      %s396 = sadd.s32 %s394, %s395
      %s397 = smul.addr %s396, 8
      %s398 = scalar_lea.vmem %s2, %s397
      %p399 = pneg %p129
      %p400 = pneg %p126
      %p401 = scmp.lt.s32.totalorder %s26, 0
      %s402 = scalar_select %p401, %s26, 0
      %s403 = smul.addr %s402, 8
      %s404 = scalar_lea.vmem %s3, %s403
      %p405 = pneg %p155
      %p406 = pneg %p152
      %p407 = scmp.lt.s32.totalorder %s26, 0
      %s408 = scalar_select %p407, %s26, 0
      %s409 = smul.addr %s408, 8
      %s410 = scalar_lea.vmem %s4, %s409
      %p411 = pneg %p181
      %p412 = pneg %p178
      %p413 = scmp.lt.s32.totalorder %s27, 0
      %s414 = scalar_select %p413, %s27, 0
      %s415 = smul.addr %s414, 8
      %s416 = scalar_lea.vmem %s5, %s415
      %p417 = pneg %p207
      %p418 = pneg %p204
      %p419 = scmp.lt.s32.totalorder %s27, 0
      %s420 = scalar_select %p419, %s27, 0
      %s421 = smul.addr %s420, 8
      %s422 = scalar_lea.vmem %s6, %s421
      %p423 = pneg %p233
      %p424 = pneg %p230
      %p425 = pneg %p263
      %p426 = pneg %p260
      %s427 = smul.u32 2, %s25
      %p428 = scmp.lt.s32.totalorder %s24, 1
      %s429 = scalar_select %p428, %s24, 1
      %p430 = scmp.lt.s32.totalorder %s427, 3
      %s431 = scalar_select %p430, %s427, 3
      %p432 = scmp.lt.s32.totalorder %s26, 0
      %s433 = scalar_select %p432, %s26, 0
      %s434 = sadd.s32 %s433, %s431
      %s435 = smul.addr %s429, 4
      %s436 = sadd.s32 %s434, %s435
      %s437 = smul.addr %s436, 8
      %s438 = scalar_lea.vmem %s7, %s437
      %s439 = smul.u32 2, %s25
      %p440 = scmp.lt.s32.totalorder %s24, 1
      %s441 = scalar_select %p440, %s24, 1
      %p442 = scmp.lt.s32.totalorder %s439, 3
      %s443 = scalar_select %p442, %s439, 3
      %p444 = scmp.lt.s32.totalorder %s26, 0
      %s445 = scalar_select %p444, %s26, 0
      %s446 = sadd.s32 %s445, %s443
      %s447 = smul.addr %s441, 4
      %s448 = sadd.s32 %s446, %s447
      %s449 = smul.addr %s448, 8
      %s450 = scalar_lea.vmem %s0, %s449
      %s451 = smul.u32 2, %s25
      %p452 = scmp.lt.s32.totalorder %s24, 1
      %s453 = scalar_select %p452, %s24, 1
      %p454 = scmp.lt.s32.totalorder %s25, 1
      %s455 = scalar_select %p454, %s25, 1
      %p456 = scmp.lt.s32.totalorder %s27, 0
      %s457 = scalar_select %p456, %s27, 0
      %s458 = sadd.s32 %s457, %s455
      %s459 = smul.addr %s453, 2
      %s460 = sadd.s32 %s458, %s459
      %s461 = smul.addr %s460, 8
      %s462 = scalar_lea.vmem %s1, %s461
      %p463 = scmp.lt.s32.totalorder %s24, 1
      %s464 = scalar_select %p463, %s24, 1
      %p465 = scmp.lt.s32.totalorder %s25, 1
      %s466 = scalar_select %p465, %s25, 1
      %p467 = scmp.lt.s32.totalorder %s27, 0
      %s468 = scalar_select %p467, %s27, 0
      %s469 = sadd.s32 %s468, %s466
      %s470 = smul.addr %s464, 2
      %s471 = sadd.s32 %s469, %s470
      %s472 = smul.addr %s471, 8
      %s473 = scalar_lea.vmem %s2, %s472
      %p474 = scmp.lt.s32.totalorder %s26, 0
      %s475 = scalar_select %p474, %s26, 0
      %s476 = smul.addr %s475, 8
      %s477 = scalar_lea.vmem %s3, %s476
      %p478 = scmp.lt.s32.totalorder %s26, 0
      %s479 = scalar_select %p478, %s26, 0
      %s480 = smul.addr %s479, 8
      %s481 = scalar_lea.vmem %s4, %s480
      %p482 = scmp.lt.s32.totalorder %s27, 0
      %s483 = scalar_select %p482, %s27, 0
      %s484 = smul.addr %s483, 8
      %s485 = scalar_lea.vmem %s5, %s484
      %p486 = scmp.lt.s32.totalorder %s27, 0
      %s487 = scalar_select %p486, %s27, 0
      %s488 = smul.addr %s487, 8
      %s489 = scalar_lea.vmem %s6, %s488
      %s490 = smul.u32 2, %s25
      %p491 = scmp.lt.s32.totalorder %s24, 1
      %s492 = scalar_select %p491, %s24, 1
      %p493 = scmp.lt.s32.totalorder %s490, 3
      %s494 = scalar_select %p493, %s490, 3
      %p495 = scmp.lt.s32.totalorder %s26, 0
      %s496 = scalar_select %p495, %s26, 0
      %s497 = sadd.s32 %s496, %s494
      %s498 = smul.addr %s492, 4
      %s499 = sadd.s32 %s497, %s498
      %s500 = smul.addr %s499, 8
      %s501 = scalar_lea.vmem %s7, %s500
      %s502 = smul.u32 2, %s25
      %s503 = smul.u32 %s26, 8
      %s504 = smul.u32 %s27, 8
      %p505 = scmp.eq.s32.totalorder %s27, 0
      // Predicated region
      $region49: #{attention_forward.4} parent=47 // pred_check
        %p506 = pneg %p505
      $region50: #{attention_forward.4} parent=47 // pred_check_branch
        %508 = sbr.rel (%p506) target = $region52
      $region51: #{attention_forward.4} parent=47 // pred_region
        %vm509 = vcmask 7168
        %510 = vst.msk [vmem:[#allocation4] sm:$0xff] %vm509, -inf
        %511 = vst.msk [vmem:[#allocation4 + $0x8] sm:$0xff] %vm509, -inf
        %512 = vst.msk [vmem:[#allocation5] sm:$0xff] %vm509, 0.0
        %513 = vst.msk [vmem:[#allocation5 + $0x8] sm:$0xff] %vm509, 0.0
        %vm514 = vcmask 64512
        %515 = vst.msk [vmem:[#allocation6] sm:$0xff] %vm514, 0.0
        %516 = vst.msk [vmem:[#allocation6 + $0x8] sm:$0xff] %vm514, 0.0
        %v517 = vld [vmem:[%s450] sm:$0xff]
        %v518 = vld [vmem:[%s450 + $0x8] sm:$0xff]
        %v519 = vld [vmem:[%s477] sm:$0xff]
        %v520 = vld [vmem:[%s481] sm:$0xff]
        %v521 = vmul.f32 %v517, %v519
        %v522 = vmul.f32 %v518, %v519
        %524 = vrot.lane.b32.xlu0 %v520, 4
        %v525 = vpop.permute.xlu0 %524
        %v527 = vmul.f32 %v517, %v525
        %v528 = vmul.f32 %v518, %v525
        %531 = vrot.lane.b32.xlu0 %v527, 124
        %v532 = vpop.permute.xlu0 %531
        %533 = vrot.lane.b32.xlu0 %v528, 124
        %v534 = vpop.permute.xlu0 %533
        %v537 = vsub.f32 %v521, %v532
        %v538 = vsub.f32 %v522, %v534
        %vm539 = vcmask 31744
        %540 = vst.msk [vmem:[#allocation2] sm:$0xff] %vm539, %v537
        %541 = vst.msk [vmem:[#allocation2 + $0x8] sm:$0xff] %vm539, %v538
        %v542 = vmul.f32 %v517, %v520
        %v543 = vmul.f32 %v518, %v520
        %545 = vrot.lane.b32.xlu0 %v519, 4
        %v546 = vpop.permute.xlu0 %545
        %v548 = vmul.f32 %v517, %v546
        %v549 = vmul.f32 %v518, %v546
        %552 = vrot.lane.b32.xlu0 %v548, 124
        %v553 = vpop.permute.xlu0 %552
        %554 = vrot.lane.b32.xlu0 %v549, 124
        %v555 = vpop.permute.xlu0 %554
        %v558 = vadd.f32 %v542, %v553
        %v559 = vadd.f32 %v543, %v555
        %562 = vrot.lane.b32.xlu0 %v558, 4
        %v563 = vpop.permute.xlu0 %562
        %564 = vrot.lane.b32.xlu0 %v559, 4
        %v565 = vpop.permute.xlu0 %564
        %vm568 = vcmask 64544
        %569 = vst.msk [vmem:[#allocation2] sm:$0xff] %vm568, %v563
        %570 = vst.msk [vmem:[#allocation2 + $0x8] sm:$0xff] %vm568, %v565
      $region52: #{attention_forward.4} parent=47 // pred_fallthru
        _
      %s571 = sadd.s32 %s503, 7
      %p572 = scmp.le.s32.totalorder %s504, %s571
      // Predicated region
      $region53: #{attention_forward.4} parent=47 // pred_check
        %p573 = pneg %p572
      $region54: #{attention_forward.4} parent=47 // pred_check_branch
        %575 = sbr.rel (%p573) target = $region56
      $region55: #{attention_forward.4} parent=47 // pred_region
        %v576 = vld [vmem:[%s462] sm:$0xff]
        %v577 = vld [vmem:[%s485] sm:$0xff]
        %v578 = vld [vmem:[%s489] sm:$0xff]
        %v579 = vmul.f32 %v576, %v577
        %581 = vrot.lane.b32.xlu0 %v578, 4
        %v582 = vpop.permute.xlu0 %581
        %v584 = vmul.f32 %v576, %v582
        %586 = vrot.lane.b32.xlu0 %v584, 124
        %v587 = vpop.permute.xlu0 %586
        %v589 = vsub.f32 %v579, %v587
        %vm590 = vcmask 31744
        %591 = vst.msk [vmem:[#allocation3] sm:$0xff] %vm590, %v589
        %v592 = vmul.f32 %v576, %v578
        %594 = vrot.lane.b32.xlu0 %v577, 4
        %v595 = vpop.permute.xlu0 %594
        %v597 = vmul.f32 %v576, %v595
        %599 = vrot.lane.b32.xlu0 %v597, 124
        %v600 = vpop.permute.xlu0 %599
        %v602 = vadd.f32 %v592, %v600
        %604 = vrot.lane.b32.xlu0 %v602, 4
        %v605 = vpop.permute.xlu0 %604
        %vm607 = vcmask 64544
        %608 = vst.msk [vmem:[#allocation3] sm:$0xff] %vm607, %v605
        %v609 = vld [vmem:[#allocation2] sm:$0xff]
        %v610 = vld [vmem:[#allocation2 + $0x8] sm:$0xff]
        %v611 = vld [vmem:[#allocation3] sm:$0xff]
        %vm612 = vcmask 64512
        %v614 = vsel %vm612, %v609, 0
        %v617 = vsel %vm612, %v611, 0
        %619 = vmatprep.subr.mxu0 0.0
        %620 = vmatpush1.xpose.msra.mxu0 %v617
        %621 = vmatprep.subr.mxu0 0.0
        %622 = vmatpush1.xpose.msra.mxu0 0.0
        %623 = vmatprep.subr.mxu0 0.0
        %624 = vmatpush1.xpose.msra.mxu0 0.0
        %625 = vmatprep.subr.mxu0 0.0
        %626 = vmatpush1.xpose.msra.mxu0 0.0
        %627 = vmatprep.subr.mxu0 0.0
        %628 = vmatpush1.xpose.msra.mxu0 0.0
        %629 = vmatprep.subr.mxu0 0.0
        %630 = vmatpush1.xpose.msra.mxu0 0.0
        %631 = vmatprep.subr.mxu0 0.0
        %632 = vmatpush1.xpose.msra.mxu0 0.0
        %633 = vmatprep.subr.mxu0 0.0
        %634 = vmatpush1.xpose.msra.mxu0 0.0
        %635 = vmatprep.subr.mxu0 0.0
        %636 = vmatpush1.xpose.msra.mxu0 0.0
        %637 = vmatprep.subr.mxu0 0.0
        %638 = vmatpush1.xpose.msra.mxu0 0.0
        %639 = vmatprep.subr.mxu0 0.0
        %640 = vmatpush1.xpose.msra.mxu0 0.0
        %641 = vmatprep.subr.mxu0 0.0
        %642 = vmatpush1.xpose.msra.mxu0 0.0
        %643 = vmatprep.subr.mxu0 0.0
        %644 = vmatpush1.xpose.msra.mxu0 0.0
        %645 = vmatprep.subr.mxu0 0.0
        %646 = vmatpush1.xpose.msra.mxu0 0.0
        %647 = vmatprep.subr.mxu0 0.0
        %648 = vmatpush1.xpose.msra.mxu0 0.0
        %649 = vmatprep.subr.mxu0 0.0
        %650 = vmatpush1.xpose.msra.mxu0 0.0
        %651 = vmatprep.subr.mxu0 0.0
        %652 = vmatpush1.xpose.msra.mxu0 0.0
        %653 = vmatprep.subr.mxu0 0.0
        %654 = vmatpush1.xpose.msra.mxu0 0.0
        %655 = vmatprep.subr.mxu0 0.0
        %656 = vmatpush1.xpose.msra.mxu0 0.0
        %657 = vmatprep.subr.mxu0 0.0
        %658 = vmatpush1.xpose.msra.mxu0 0.0
        %659 = vmatprep.subr.mxu0 0.0
        %660 = vmatpush1.xpose.msra.mxu0 0.0
        %661 = vmatprep.subr.mxu0 0.0
        %662 = vmatpush1.xpose.msra.mxu0 0.0
        %663 = vmatprep.subr.mxu0 0.0
        %664 = vmatpush1.xpose.msra.mxu0 0.0
        %665 = vmatprep.subr.mxu0 0.0
        %666 = vmatpush1.xpose.msra.mxu0 0.0
        %667 = vmatprep.subr.mxu0 0.0
        %668 = vmatpush1.xpose.msra.mxu0 0.0
        %669 = vmatprep.subr.mxu0 0.0
        %670 = vmatpush1.xpose.msra.mxu0 0.0
        %671 = vmatprep.subr.mxu0 0.0
        %672 = vmatpush1.xpose.msra.mxu0 0.0
        %673 = vmatprep.subr.mxu0 0.0
        %674 = vmatpush1.xpose.msra.mxu0 0.0
        %675 = vmatprep.subr.mxu0 0.0
        %676 = vmatpush1.xpose.msra.mxu0 0.0
        %677 = vmatprep.subr.mxu0 0.0
        %678 = vmatpush1.xpose.msra.mxu0 0.0
        %679 = vmatprep.subr.mxu0 0.0
        %680 = vmatpush1.xpose.msra.mxu0 0.0
        %681 = vmatprep.subr.mxu0 0.0
        %682 = vmatpush1.xpose.msra.mxu0 0.0
        %683 = vmatprep.mubr.f32.mxu0 0.0
        %684 = vmatmul.mubr.f32.gmra.mrb[0].mxu0 %v614
        %v685 = vpop.f32.mrb[0].mxu0
        %v686 = vadd.f32 0.0, %v685
        %v687 = vpop.f32.mrb[0].mxu0
        %688 = vdwg.mxu0
        %v690 = vsel %vm612, %v610, 0
        %692 = vmatprep.subr.mxu0 0.0
        %693 = vmatpush1.xpose.msra.mxu0 %v617
        %694 = vmatprep.subr.mxu0 0.0
        %695 = vmatpush1.xpose.msra.mxu0 0.0
        %696 = vmatprep.subr.mxu0 0.0
        %697 = vmatpush1.xpose.msra.mxu0 0.0
        %698 = vmatprep.subr.mxu0 0.0
        %699 = vmatpush1.xpose.msra.mxu0 0.0
        %700 = vmatprep.subr.mxu0 0.0
        %701 = vmatpush1.xpose.msra.mxu0 0.0
        %702 = vmatprep.subr.mxu0 0.0
        %703 = vmatpush1.xpose.msra.mxu0 0.0
        %704 = vmatprep.subr.mxu0 0.0
        %705 = vmatpush1.xpose.msra.mxu0 0.0
        %706 = vmatprep.subr.mxu0 0.0
        %707 = vmatpush1.xpose.msra.mxu0 0.0
        %708 = vmatprep.subr.mxu0 0.0
        %709 = vmatpush1.xpose.msra.mxu0 0.0
        %710 = vmatprep.subr.mxu0 0.0
        %711 = vmatpush1.xpose.msra.mxu0 0.0
        %712 = vmatprep.subr.mxu0 0.0
        %713 = vmatpush1.xpose.msra.mxu0 0.0
        %714 = vmatprep.subr.mxu0 0.0
        %715 = vmatpush1.xpose.msra.mxu0 0.0
        %716 = vmatprep.subr.mxu0 0.0
        %717 = vmatpush1.xpose.msra.mxu0 0.0
        %718 = vmatprep.subr.mxu0 0.0
        %719 = vmatpush1.xpose.msra.mxu0 0.0
        %720 = vmatprep.subr.mxu0 0.0
        %721 = vmatpush1.xpose.msra.mxu0 0.0
        %722 = vmatprep.subr.mxu0 0.0
        %723 = vmatpush1.xpose.msra.mxu0 0.0
        %724 = vmatprep.subr.mxu0 0.0
        %725 = vmatpush1.xpose.msra.mxu0 0.0
        %726 = vmatprep.subr.mxu0 0.0
        %727 = vmatpush1.xpose.msra.mxu0 0.0
        %728 = vmatprep.subr.mxu0 0.0
        %729 = vmatpush1.xpose.msra.mxu0 0.0
        %730 = vmatprep.subr.mxu0 0.0
        %731 = vmatpush1.xpose.msra.mxu0 0.0
        %732 = vmatprep.subr.mxu0 0.0
        %733 = vmatpush1.xpose.msra.mxu0 0.0
        %734 = vmatprep.subr.mxu0 0.0
        %735 = vmatpush1.xpose.msra.mxu0 0.0
        %736 = vmatprep.subr.mxu0 0.0
        %737 = vmatpush1.xpose.msra.mxu0 0.0
        %738 = vmatprep.subr.mxu0 0.0
        %739 = vmatpush1.xpose.msra.mxu0 0.0
        %740 = vmatprep.subr.mxu0 0.0
        %741 = vmatpush1.xpose.msra.mxu0 0.0
        %742 = vmatprep.subr.mxu0 0.0
        %743 = vmatpush1.xpose.msra.mxu0 0.0
        %744 = vmatprep.subr.mxu0 0.0
        %745 = vmatpush1.xpose.msra.mxu0 0.0
        %746 = vmatprep.subr.mxu0 0.0
        %747 = vmatpush1.xpose.msra.mxu0 0.0
        %748 = vmatprep.subr.mxu0 0.0
        %749 = vmatpush1.xpose.msra.mxu0 0.0
        %750 = vmatprep.subr.mxu0 0.0
        %751 = vmatpush1.xpose.msra.mxu0 0.0
        %752 = vmatprep.subr.mxu0 0.0
        %753 = vmatpush1.xpose.msra.mxu0 0.0
        %754 = vmatprep.subr.mxu0 0.0
        %755 = vmatpush1.xpose.msra.mxu0 0.0
        %756 = vmatprep.mubr.f32.mxu0 0.0
        %757 = vmatmul.mubr.f32.gmra.mrb[0].mxu0 %v690
        %v758 = vpop.f32.mrb[0].mxu0
        %v759 = vadd.f32 0.0, %v758
        %v760 = vpop.f32.mrb[0].mxu0
        %761 = vdwg.mxu0
        %v762 = vlaneseq
        %v763 = vshrl.u32 %v762, 7
        %v764 = vstv %s503
        %v765 = vadd.s32 %v763, %v764
        %v766 = vlaneseq
        %v767 = vand.u32 %v766, 127
        %v768 = vstv %s504
        %v769 = vadd.s32 %v767, %v768
        %vm770 = vcmp.le.s32.totalorder %v769, %v765
        %v771 = vsel %vm770, 1, 0
        %vm772 = vcmp.eq.s32.totalorder %v771, 1
        %v773 = vsel %vm772, %v686, -inf
        %v774 = vsel %vm772, %v759, -inf
        %v775 = vld [vmem:[#allocation4] sm:$0xff]
        %v776 = vld [vmem:[#allocation4 + $0x8] sm:$0xff]
        %v777 = vsel %vm612, %v773, -inf
        %778 = vmax.xlane.f32.xlu0 %v777
        %v779 = vpop.xlane.xlu0 %778
        %v780 = vsel %vm612, %v774, -inf
        %781 = vmax.xlane.f32.xlu0 %v780
        %v782 = vpop.xlane.xlu0 %781
        %v783 = vmax.f32 %v775, %v779
        %v784 = vmax.f32 %v776, %v782
        %v785 = vsub.f32 %v775, %v783
        %v786 = vsub.f32 %v776, %v784
        %v787 = vmul.f32 %v785, 1.442695
        %v788 = vpow.pop %v787
        %v789 = vmul.f32 %v786, 1.442695
        %v790 = vpow.pop %v789
        %792 = vset.pattern.permute.xlu0 0
        %793 = vperm.xlu0 %792, %v783
        %v794 = vpop.permute.xlu0 %793
        %797 = vset.pattern.permute.xlu0 0
        %798 = vperm.xlu0 %797, %v784
        %v799 = vpop.permute.xlu0 %798
        %v801 = vsub.f32 %v773, %v794
        %v802 = vsub.f32 %v774, %v799
        %v803 = vmul.f32 %v801, 1.442695
        %v804 = vpow.pop %v803
        %v805 = vmul.f32 %v802, 1.442695
        %v806 = vpow.pop %v805
        %v807 = vld [vmem:[#allocation5] sm:$0xff]
        %v808 = vld [vmem:[#allocation5 + $0x8] sm:$0xff]
        %v809 = vmul.f32 %v788, %v807
        %v810 = vmul.f32 %v790, %v808
        %v811 = vsel %vm612, %v804, 0.0
        %812 = vadd.xlane.f32.xlu0 %v811
        %v813 = vpop.xlane.xlu0 %812
        %v814 = vsel %vm612, %v806, 0.0
        %815 = vadd.xlane.f32.xlu0 %v814
        %v816 = vpop.xlane.xlu0 %815
        %v817 = vadd.f32 %v809, %v813
        %v818 = vadd.f32 %v810, %v816
        %vm819 = vcmask 7168
        %820 = vst.msk [vmem:[#allocation5] sm:$0xff] %vm819, %v817
        %821 = vst.msk [vmem:[#allocation5 + $0x8] sm:$0xff] %vm819, %v818
        %v822 = vld [vmem:[%s473] sm:$0xff]
        %v824 = vsel %vm612, %v804, 0
        %826 = vmatprep.subr.mxu0 0.0
        %827 = vmatpush1.msra.mxu0 %v822
        %828 = vmatprep.subr.mxu0 0.0
        %829 = vmatpush1.msra.mxu0 0.0
        %830 = vmatprep.subr.mxu0 0.0
        %831 = vmatpush1.msra.mxu0 0.0
        %832 = vmatprep.subr.mxu0 0.0
        %833 = vmatpush1.msra.mxu0 0.0
        %834 = vmatprep.subr.mxu0 0.0
        %835 = vmatpush1.msra.mxu0 0.0
        %836 = vmatprep.subr.mxu0 0.0
        %837 = vmatpush1.msra.mxu0 0.0
        %838 = vmatprep.subr.mxu0 0.0
        %839 = vmatpush1.msra.mxu0 0.0
        %840 = vmatprep.subr.mxu0 0.0
        %841 = vmatpush1.msra.mxu0 0.0
        %842 = vmatprep.subr.mxu0 0.0
        %843 = vmatpush1.msra.mxu0 0.0
        %844 = vmatprep.subr.mxu0 0.0
        %845 = vmatpush1.msra.mxu0 0.0
        %846 = vmatprep.subr.mxu0 0.0
        %847 = vmatpush1.msra.mxu0 0.0
        %848 = vmatprep.subr.mxu0 0.0
        %849 = vmatpush1.msra.mxu0 0.0
        %850 = vmatprep.subr.mxu0 0.0
        %851 = vmatpush1.msra.mxu0 0.0
        %852 = vmatprep.subr.mxu0 0.0
        %853 = vmatpush1.msra.mxu0 0.0
        %854 = vmatprep.subr.mxu0 0.0
        %855 = vmatpush1.msra.mxu0 0.0
        %856 = vmatprep.subr.mxu0 0.0
        %857 = vmatpush1.msra.mxu0 0.0
        %858 = vmatprep.subr.mxu0 0.0
        %859 = vmatpush1.msra.mxu0 0.0
        %860 = vmatprep.subr.mxu0 0.0
        %861 = vmatpush1.msra.mxu0 0.0
        %862 = vmatprep.subr.mxu0 0.0
        %863 = vmatpush1.msra.mxu0 0.0
        %864 = vmatprep.subr.mxu0 0.0
        %865 = vmatpush1.msra.mxu0 0.0
        %866 = vmatprep.subr.mxu0 0.0
        %867 = vmatpush1.msra.mxu0 0.0
        %868 = vmatprep.subr.mxu0 0.0
        %869 = vmatpush1.msra.mxu0 0.0
        %870 = vmatprep.subr.mxu0 0.0
        %871 = vmatpush1.msra.mxu0 0.0
        %872 = vmatprep.subr.mxu0 0.0
        %873 = vmatpush1.msra.mxu0 0.0
        %874 = vmatprep.subr.mxu0 0.0
        %875 = vmatpush1.msra.mxu0 0.0
        %876 = vmatprep.subr.mxu0 0.0
        %877 = vmatpush1.msra.mxu0 0.0
        %878 = vmatprep.subr.mxu0 0.0
        %879 = vmatpush1.msra.mxu0 0.0
        %880 = vmatprep.subr.mxu0 0.0
        %881 = vmatpush1.msra.mxu0 0.0
        %882 = vmatprep.subr.mxu0 0.0
        %883 = vmatpush1.msra.mxu0 0.0
        %884 = vmatprep.subr.mxu0 0.0
        %885 = vmatpush1.msra.mxu0 0.0
        %886 = vmatprep.subr.mxu0 0.0
        %887 = vmatpush1.msra.mxu0 0.0
        %888 = vmatprep.subr.mxu0 0.0
        %889 = vmatpush1.msra.mxu0 0.0
        %890 = vmatprep.mubr.f32.mxu0 0.0
        %891 = vmatmul.mubr.f32.gmra.mrb[0].mxu0 %v824
        %v892 = vpop.f32.mrb[0].mxu0
        %v893 = vadd.f32 0.0, %v892
        %v894 = vpop.f32.mrb[0].mxu0
        %895 = vdwg.mxu0
        %v897 = vsel %vm612, %v806, 0
        %899 = vmatprep.subr.mxu0 0.0
        %900 = vmatpush1.msra.mxu0 %v822
        %901 = vmatprep.subr.mxu0 0.0
        %902 = vmatpush1.msra.mxu0 0.0
        %903 = vmatprep.subr.mxu0 0.0
        %904 = vmatpush1.msra.mxu0 0.0
        %905 = vmatprep.subr.mxu0 0.0
        %906 = vmatpush1.msra.mxu0 0.0
        %907 = vmatprep.subr.mxu0 0.0
        %908 = vmatpush1.msra.mxu0 0.0
        %909 = vmatprep.subr.mxu0 0.0
        %910 = vmatpush1.msra.mxu0 0.0
        %911 = vmatprep.subr.mxu0 0.0
        %912 = vmatpush1.msra.mxu0 0.0
        %913 = vmatprep.subr.mxu0 0.0
        %914 = vmatpush1.msra.mxu0 0.0
        %915 = vmatprep.subr.mxu0 0.0
        %916 = vmatpush1.msra.mxu0 0.0
        %917 = vmatprep.subr.mxu0 0.0
        %918 = vmatpush1.msra.mxu0 0.0
        %919 = vmatprep.subr.mxu0 0.0
        %920 = vmatpush1.msra.mxu0 0.0
        %921 = vmatprep.subr.mxu0 0.0
        %922 = vmatpush1.msra.mxu0 0.0
        %923 = vmatprep.subr.mxu0 0.0
        %924 = vmatpush1.msra.mxu0 0.0
        %925 = vmatprep.subr.mxu0 0.0
        %926 = vmatpush1.msra.mxu0 0.0
        %927 = vmatprep.subr.mxu0 0.0
        %928 = vmatpush1.msra.mxu0 0.0
        %929 = vmatprep.subr.mxu0 0.0
        %930 = vmatpush1.msra.mxu0 0.0
        %931 = vmatprep.subr.mxu0 0.0
        %932 = vmatpush1.msra.mxu0 0.0
        %933 = vmatprep.subr.mxu0 0.0
        %934 = vmatpush1.msra.mxu0 0.0
        %935 = vmatprep.subr.mxu0 0.0
        %936 = vmatpush1.msra.mxu0 0.0
        %937 = vmatprep.subr.mxu0 0.0
        %938 = vmatpush1.msra.mxu0 0.0
        %939 = vmatprep.subr.mxu0 0.0
        %940 = vmatpush1.msra.mxu0 0.0
        %941 = vmatprep.subr.mxu0 0.0
        %942 = vmatpush1.msra.mxu0 0.0
        %943 = vmatprep.subr.mxu0 0.0
        %944 = vmatpush1.msra.mxu0 0.0
        %945 = vmatprep.subr.mxu0 0.0
        %946 = vmatpush1.msra.mxu0 0.0
        %947 = vmatprep.subr.mxu0 0.0
        %948 = vmatpush1.msra.mxu0 0.0
        %949 = vmatprep.subr.mxu0 0.0
        %950 = vmatpush1.msra.mxu0 0.0
        %951 = vmatprep.subr.mxu0 0.0
        %952 = vmatpush1.msra.mxu0 0.0
        %953 = vmatprep.subr.mxu0 0.0
        %954 = vmatpush1.msra.mxu0 0.0
        %955 = vmatprep.subr.mxu0 0.0
        %956 = vmatpush1.msra.mxu0 0.0
        %957 = vmatprep.subr.mxu0 0.0
        %958 = vmatpush1.msra.mxu0 0.0
        %959 = vmatprep.subr.mxu0 0.0
        %960 = vmatpush1.msra.mxu0 0.0
        %961 = vmatprep.subr.mxu0 0.0
        %962 = vmatpush1.msra.mxu0 0.0
        %963 = vmatprep.mubr.f32.mxu0 0.0
        %964 = vmatmul.mubr.f32.gmra.mrb[0].mxu0 %v897
        %v965 = vpop.f32.mrb[0].mxu0
        %v966 = vadd.f32 0.0, %v965
        %v967 = vpop.f32.mrb[0].mxu0
        %968 = vdwg.mxu0
        %v969 = vld [vmem:[#allocation6] sm:$0xff]
        %v970 = vld [vmem:[#allocation6 + $0x8] sm:$0xff]
        %972 = vset.pattern.permute.xlu0 0
        %973 = vperm.xlu0 %972, %v788
        %v974 = vpop.permute.xlu0 %973
        %977 = vset.pattern.permute.xlu0 0
        %978 = vperm.xlu0 %977, %v790
        %v979 = vpop.permute.xlu0 %978
        %v981 = vmul.f32 %v974, %v969
        %v982 = vmul.f32 %v979, %v970
        %v983 = vadd.f32 %v981, %v893
        %v984 = vadd.f32 %v982, %v966
        %985 = vst.msk [vmem:[#allocation6] sm:$0xff] %vm612, %v983
        %986 = vst.msk [vmem:[#allocation6 + $0x8] sm:$0xff] %vm612, %v984
        %987 = vst.msk [vmem:[#allocation4] sm:$0xff] %vm819, %v783
        %988 = vst.msk [vmem:[#allocation4 + $0x8] sm:$0xff] %vm819, %v784
      $region56: #{attention_forward.4} parent=47 // pred_fallthru
        _
      // Predicated region
      $region57: #{attention_forward.4} parent=47 // pred_check
        %p989 = pneg %p505
      $region58: #{attention_forward.4} parent=47 // pred_check_branch
        %991 = sbr.rel (%p989) target = $region60
      $region59: #{attention_forward.4} parent=47 // pred_region
        %v992 = vld [vmem:[#allocation5] sm:$0xff]
        %v993 = vld [vmem:[#allocation5 + $0x8] sm:$0xff]
        %v994 = vrcp.pop %v992
        %v995 = vrcp.pop %v993
        %v996 = vld [vmem:[#allocation6] sm:$0xff]
        %v997 = vld [vmem:[#allocation6 + $0x8] sm:$0xff]
        %999 = vset.pattern.permute.xlu0 0
        %1000 = vperm.xlu0 %999, %v994
        %v1001 = vpop.permute.xlu0 %1000
        %1004 = vset.pattern.permute.xlu0 0
        %1005 = vperm.xlu0 %1004, %v995
        %v1006 = vpop.permute.xlu0 %1005
        %v1008 = vmul.f32 %v996, %v1001
        %v1009 = vmul.f32 %v997, %v1006
        %vm1010 = vcmask 64512
        %1011 = vst.msk [vmem:[%s501] sm:$0xff] %vm1010, %v1008
        %1012 = vst.msk [vmem:[%s501 + $0x8] sm:$0xff] %vm1010, %v1009
      $region60: #{attention_forward.4} parent=47 // pred_fallthru
        _
      %s1013 = smul.u32 2, %s25
      %p1014 = scmp.lt.s32.totalorder %s24, 1
      %s1015 = scalar_select %p1014, %s24, 1
      %p1016 = scmp.lt.s32.totalorder %s1013, 3
      %s1017 = scalar_select %p1016, %s1013, 3
      %p1018 = scmp.lt.s32.totalorder %s26, 0
      %s1019 = scalar_select %p1018, %s26, 0
      %s1020 = sadd.s32 %s1019, %s1017
      %s1021 = smul.addr %s1015, 4
      %s1022 = sadd.s32 %s1020, %s1021
      %s1023 = smul.addr %s1022, 8
      %s1024 = scalar_lea.vmem %s7, %s1023
      // Predicated region
      $region61: #{attention_forward.4} parent=47 // pred_check
        %p1025 = pneg %p260
      $region62: #{attention_forward.4} parent=47 // pred_check_branch
        %1027 = sbr.rel (%p1025) target = $region64
      $region63: #{attention_forward.4} parent=47 // pred_region
        %s1028 = smul.u32 2, %s25
      $region64: #{attention_forward.4} parent=47 // pred_fallthru
        _
    $region48: #{attention_forward.4} parent=5 // pred_fallthru
      _
    %p1029 = scmp.le.s32.totalorder 2, %s13
    // Predicated region
    $region65: #{attention_forward.4} parent=5 // pred_check
      %p1030 = pneg %p1029
    $region66: #{attention_forward.4} parent=5 // pred_check_branch
      %1032 = sbr.rel (%p1030) target = $region68
    $region67: #{attention_forward.4} parent=5 // pred_region
      %s1033 = ssub.s32 %s13, 2
      // Predicated region
      $region69: #{attention_forward.4} parent=67 // pred_check
        %p1034 = pneg %p266
      $region70: #{attention_forward.4} parent=67 // pred_check_branch
        %1036 = sbr.rel (%p1034) target = $region72
      $region71: #{attention_forward.4} parent=67 // pred_region
        %s1037 = smul.u32 2, %s29
        %p1038 = scmp.lt.s32.totalorder %s28, 1
        %s1039 = scalar_select %p1038, %s28, 1
        %p1040 = scmp.lt.s32.totalorder %s1037, 3
        %s1041 = scalar_select %p1040, %s1037, 3
        %p1042 = scmp.lt.s32.totalorder %s30, 0
        %s1043 = scalar_select %p1042, %s30, 0
        %s1044 = sadd.s32 %s1043, %s1041
        %s1045 = smul.addr %s1039, 4
        %s1046 = sadd.s32 %s1044, %s1045
        %s1047 = smul.addr %s1046, 8
        %s1048 = scalar_lea.vmem %s7, %s1047
      $region72: #{attention_forward.4} parent=67 // pred_fallthru
        _
    $region68: #{attention_forward.4} parent=5 // pred_fallthru
      _
  $region6: #{attention_forward.4} parent=0 // loop_footer
    %s17 = sadd.s32 1, %s13
  $region7: #{attention_forward.4} parent=0 // loop_footer_branch
    %12 = sbr.rel target = $region3
  $region8: #{attention_forward.4} parent=0 // loop_exit
    _

</llo_original>
